<compile_context>
chip_gen: v5e
topology: v5e:2x2
jax: 0.10.0
libtpu: 0.0.40
codegen_flags: <defaults>
</compile_context>

<pallas_src>
import functools

import jax
import jax.numpy as jnp
from jax.experimental import pallas as pl
from jax.experimental.pallas import tpu as pltpu

LN_EPS = 1e-5  # PyTorch nn.LayerNorm default


def _round_up(x, m):
    return ((x + m - 1) // m) * m


def _vmem_capacity_bytes():
    try:
        return int(pltpu.get_tpu_info().vmem_capacity_bytes)
    except Exception:
        return 64 * 1024 * 1024  # conservative: v7x per-TensorCore VMEM


def _layernorm_relu(h, gamma, beta, n_true, n_pad):
    """LayerNorm (biased variance, shifted two-pass) + affine + ReLU in f32.

    `h` may carry `n_pad` trailing zero-valued padding lanes (produced by zero
    weight columns).  Statistics are corrected exactly for them, and gamma/beta
    are zero on the pad lanes, so padded outputs are exactly 0.
    """
    inv_n = 1.0 / n_true
    mean = jnp.sum(h, axis=-1, keepdims=True) * inv_n
    centered = h - mean
    ss = jnp.sum(centered * centered, axis=-1, keepdims=True)
    if n_pad:
        # each zero pad lane contributed (0 - mean)^2 = mean^2; remove exactly
        ss = ss - n_pad * (mean * mean)
    var = jnp.maximum(ss * inv_n, 0.0)
    inv = jax.lax.rsqrt(var + LN_EPS)  # EUP slot, effectively free
    return jnp.maximum(centered * inv * gamma + beta, 0.0)


def mlp_kernel(x_ref, w1_ref, g1_ref, b1_ref, w2_ref, g2_ref, b2_ref, w3_ref,
               o_ref, h1_scr, h2_scr, *, n1, pad1, n2, pad2):
    # Linear(dim_in -> 2H, no bias): bf16 operands, f32 accumulation on the MXU.
    x = x_ref[...].astype(jnp.bfloat16)
    h = jnp.dot(x, w1_ref[...], preferred_element_type=jnp.float32)
    # LayerNorm + ReLU in f32; stage the bf16 activation in explicit scratch so
    # the f32 intermediate's live range ends before the next matmul.
    h1_scr[...] = _layernorm_relu(h, g1_ref[...], b1_ref[...], n1, pad1
                                  ).astype(jnp.bfloat16)

    # Linear(2H -> H, no bias) + LayerNorm + ReLU
    h = jnp.dot(h1_scr[...], w2_ref[...], preferred_element_type=jnp.float32)
    h2_scr[...] = _layernorm_relu(h, g2_ref[...], b2_ref[...], n2, pad2
                                  ).astype(jnp.bfloat16)

    # Linear(H -> dim_out_padded, no bias) + final ReLU (activation_name='ReLU')
    out = jnp.dot(h2_scr[...], w3_ref[...], preferred_element_type=jnp.float32)
    o_ref[...] = jnp.maximum(out, 0.0).astype(o_ref.dtype)


def prepare_params(params, *, pad_dim_in=None):
    """One-time layout prep (call once, outside the per-forward path):
    pad feature dims to multiples of 128 with zeros and cast matmul weights to
    bf16.  LN affine params stay f32 (zero on pad lanes)."""
    w1, g1, b1 = params["w1"], params["g1"], params["b1"]
    w2, g2, b2 = params["w2"], params["g2"], params["b2"]
    w3 = params["w3"]
    dim_in, d_h2 = w1.shape
    d_h = w2.shape[1]
    d_out = w3.shape[1]

    d_h2_p = _round_up(d_h2, 128)
    d_h_p = _round_up(d_h, 128)
    d_out_p = _round_up(d_out, 128)

    # dim_in is only a contraction dim, so padding it is LN-safe.  Only pad when
    # the relative inflation of x is small (<= 25%); otherwise the wrapper-side
    # HBM copy of a 4x-wider x costs more than the MXU K-granularity win.
    d_in_p = _round_up(dim_in, 128)
    if pad_dim_in is None:
        pad_dim_in = (d_in_p != dim_in) and (d_in_p - dim_in) * 4 <= dim_in
    if not pad_dim_in:
        d_in_p = dim_in

    bf = jnp.bfloat16
    return {
        "w1": jnp.pad(w1, ((0, d_in_p - dim_in), (0, d_h2_p - d_h2))).astype(bf),
        "g1": jnp.pad(g1, ((0, 0), (0, d_h2_p - d_h2))).astype(jnp.float32),
        "b1": jnp.pad(b1, ((0, 0), (0, d_h2_p - d_h2))).astype(jnp.float32),
        "w2": jnp.pad(w2, ((0, d_h2_p - d_h2), (0, d_h_p - d_h))).astype(bf),
        "g2": jnp.pad(g2, ((0, 0), (0, d_h_p - d_h))).astype(jnp.float32),
        "b2": jnp.pad(b2, ((0, 0), (0, d_h_p - d_h))).astype(jnp.float32),
        "w3": jnp.pad(w3, ((0, d_h_p - d_h), (0, d_out_p - d_out))).astype(bf),
        "dim_in": dim_in, "d_in_p": d_in_p,
        "d_h2": d_h2, "d_h2_p": d_h2_p,
        "d_h": d_h, "d_h_p": d_h_p,
        "d_out": d_out, "d_out_p": d_out_p,
    }


def _pick_tm(B, tm_cap):
    """Row tile: multiple of 8, <= tm_cap.  Prefers a tile that divides B (no
    wrapper batch pad / output slice) and yields >= 2 grid steps so the
    'parallel' axis can shard across both v7x TensorCores."""
    tm_cap = max(8, (tm_cap // 8) * 8)
    if B % 8 == 0:
        t = (min(tm_cap, B) // 8) * 8
        while t >= 8:
            if B % t == 0:
                if B // t == 1 and t >= 16 and (t // 2) % 8 == 0:
                    t //= 2  # grid of 2 -> both TCs busy on v7x
                return t, B  # no batch padding needed
            t -= 8
    tm = min(tm_cap, _round_up(B, 8))
    return tm, _round_up(B, tm)


def mlp_forward(x, prep, *, block_rows=512):
    """x: [B, dim_in] float32.  prep: output of prepare_params."""
    B, dim_in = x.shape
    assert dim_in == prep["dim_in"], "x feature dim mismatch"
    d_in_p, d_h2_p = prep["d_in_p"], prep["d_h2_p"]
    d_h_p, d_out_p = prep["d_h_p"], prep["d_out_p"]
    d_out = prep["d_out"]

    if d_in_p != dim_in:  # K-align the first matmul (LN-safe, zero columns)
        x = jnp.pad(x, ((0, 0), (0, d_in_p - dim_in)))

    # ---- VMEM budget -> row tile -------------------------------------------
    cap = _vmem_capacity_bytes()          # 64 MiB (v7x/TC) or 128 MiB (v5e/v6e)
    vmem_limit = int(cap * 4 // 5)        # ~51 MiB on v7x, ~102 MiB on v5e/v6e
    # resident bf16 weights (single-buffered) + f32 LN affine params
    weight_bytes = (2 * (d_in_p * d_h2_p + d_h2_p * d_h_p + d_h_p * d_out_p)
                    + 4 * 2 * (d_h2_p + d_h_p))
    # per-row: f32 x tile (x2 bufs) + f32 out tile (x2) + f32 intermediates
    # (2H + H + out) + bf16 staging scratch (2H + H)
    per_row = (2 * 4 * d_in_p) + (2 * 4 * d_out_p) \
        + 4 * (d_h2_p + d_h_p + d_out_p) + 2 * (d_h2_p + d_h_p)
    budget = vmem_limit - weight_bytes - (4 << 20)  # headroom for Mosaic internals
    if budget < per_row * 8:
        # TODO(synk): resident weights (nearly) exhaust this generation's VMEM;
        # a contraction-tiled inner pltpu.emit_pipeline over the weights would
        # be needed for such hidden sizes.  Fall back to the minimum row tile.
        tm_cap = 8
    else:
        tm_cap = min(block_rows, budget // per_row)
    tm, B_p = _pick_tm(B, tm_cap)
    if B_p != B:
        x = jnp.pad(x, ((0, B_p - B), (0, 0)))  # zero rows are LN-safe
    grid = (B_p // tm,)

    kernel = functools.partial(
        mlp_kernel,
        n1=prep["d_h2"], pad1=d_h2_p - prep["d_h2"],
        n2=prep["d_h"], pad2=d_h_p - prep["d_h"])

    def run(weight_buffers):
        def resident(shape):
            kw = {}
            if weight_buffers is not None:
                kw["pipeline_mode"] = pl.Buffered(weight_buffers)
            return pl.BlockSpec(shape, lambda i: tuple(0 for _ in shape), **kw)

        return pl.pallas_call(
            kernel,
            out_shape=jax.ShapeDtypeStruct((B_p, d_out_p), x.dtype),
            grid_spec=pltpu.PrefetchScalarGridSpec(
                num_scalar_prefetch=0,
                grid=grid,
                in_specs=[
                    pl.BlockSpec((tm, d_in_p), lambda i: (i, 0)),  # x row tile
                    resident((d_in_p, d_h2_p)),                    # w1 (bf16)
                    resident((1, d_h2_p)),                         # gamma1 (f32)
                    resident((1, d_h2_p)),                         # beta1  (f32)
                    resident((d_h2_p, d_h_p)),                     # w2 (bf16)
                    resident((1, d_h_p)),                          # gamma2 (f32)
                    resident((1, d_h_p)),                          # beta2  (f32)
                    resident((d_h_p, d_out_p)),                    # w3 (bf16)
                ],
                out_specs=pl.BlockSpec((tm, d_out_p), lambda i: (i, 0)),
                scratch_shapes=[pltpu.VMEM((tm, d_h2_p), jnp.bfloat16),
                                pltpu.VMEM((tm, d_h_p), jnp.bfloat16)],
            ),
            compiler_params=pltpu.CompilerParams(
                dimension_semantics=("parallel",),  # megacore-shardable on v7x
                vmem_limit_bytes=vmem_limit,
            ),
        )(x, prep["w1"], prep["g1"], prep["b1"], prep["w2"], prep["g2"],
          prep["b2"], prep["w3"])

    try:
        out = run(1)      # single-buffer the invariant weights (halves their VMEM)
    except Exception:
        out = run(None)   # fallback: default double-buffering (still correct)

    if B_p != B or d_out_p != d_out:
        out = out[:B, :d_out]
    return out
    # TODO(synk): if the caller can produce/consume bf16 activations, switching
    # kernel I/O to bf16 halves x/out HBM traffic (most valuable on v5e).


def xavier_normal(key, fan_in, fan_out):
    std = (2.0 / (fan_in + fan_out)) ** 0.5
    # stored as [in, out]; xavier_normal is symmetric in fan_in/fan_out
    return std * jax.random.normal(key, (fan_in, fan_out), jnp.float32)


def init_params(key, dim_in, dim_hidden, dim_out):
    k1, k2, k3 = jax.random.split(key, 3)
    d_h2 = dim_hidden * 2
    return {
        "w1": xavier_normal(k1, dim_in, d_h2),
        "g1": jnp.ones((1, d_h2), jnp.float32),     # LayerNorm weight = 1
        "b1": jnp.zeros((1, d_h2), jnp.float32),    # LayerNorm bias = 0
        "w2": xavier_normal(k2, d_h2, dim_hidden),
        "g2": jnp.ones((1, dim_hidden), jnp.float32),
        "b2": jnp.zeros((1, dim_hidden), jnp.float32),
        "w3": xavier_normal(k3, dim_hidden, dim_out),
    }


def mlp_reference(x, p):
    """Pure-JAX reference with the same bf16-matmul / f32-LN precision choices."""
    def ln(h, g, b):
        m = jnp.mean(h, -1, keepdims=True)
        v = jnp.mean((h - m) ** 2, -1, keepdims=True)
        return (h - m) * jax.lax.rsqrt(v + LN_EPS) * g + b

    bf = jnp.bfloat16
    h = jnp.dot(x.astype(bf), p["w1"].astype(bf), preferred_element_type=jnp.float32)
    h = jnp.maximum(ln(h, p["g1"], p["b1"]), 0.0)
    h = jnp.dot(h.astype(bf), p["w2"].astype(bf), preferred_element_type=jnp.float32)
    h = jnp.maximum(ln(h, p["g2"], p["b2"]), 0.0)
    out = jnp.dot(h.astype(bf), p["w3"].astype(bf), preferred_element_type=jnp.float32)
    return jnp.maximum(out, 0.0)


def mlp_reference_f32(x, p):
    """Full-f32 reference matching the PyTorch module exactly (for sanity)."""
    def ln(h, g, b):
        m = jnp.mean(h, -1, keepdims=True)
        v = jnp.mean((h - m) ** 2, -1, keepdims=True)
        return (h - m) * jax.lax.rsqrt(v + LN_EPS) * g + b

    h = jnp.maximum(ln(x @ p["w1"], p["g1"], p["b1"]), 0.0)
    h = jnp.maximum(ln(h @ p["w2"], p["g2"], p["b2"]), 0.0)
    return jnp.maximum(h @ p["w3"], 0.0)


if __name__ == "__main__":
    dim_in, dim_hidden, dim_out = 32, 32, 16
    batch = 64  # tm auto-picks 32 -> grid=(2,), exercising tiling/megacore path

    key = jax.random.PRNGKey(0)
    kx, kp = jax.random.split(key)
    x = jax.random.normal(kx, (batch, dim_in), jnp.float32)
    params = init_params(kp, dim_in, dim_hidden, dim_out)
    prep = prepare_params(params)  # one-time weight padding + bf16 cast

    out = jax.block_until_ready(mlp_forward(x, prep))
    assert out.shape == (batch, dim_out)

    ref = mlp_reference(x, params)
    assert jnp.allclose(out, ref, atol=2e-3, rtol=2e-3), \
        float(jnp.max(jnp.abs(out - ref)))

    # Loose check vs. the exact f32 PyTorch-equivalent path (bf16 matmul noise).
    ref32 = mlp_reference_f32(x, params)
    assert jnp.allclose(out, ref32, atol=1e-1, rtol=1e-1), \
        float(jnp.max(jnp.abs(out - ref32)))

    print("KERNEL_OK")
</pallas_src>

<mosaic_0001>
module attributes {stable_mosaic.version = 11 : i64} {
  func.func @mlp_kernel(%arg0: i32, %arg1: memref<32x32xf32, #tpu.memory_space<vmem>>, %arg2: memref<32x128xbf16, #tpu.memory_space<vmem>>, %arg3: memref<1x128xf32, #tpu.memory_space<vmem>>, %arg4: memref<1x128xf32, #tpu.memory_space<vmem>>, %arg5: memref<128x128xbf16, #tpu.memory_space<vmem>>, %arg6: memref<1x128xf32, #tpu.memory_space<vmem>>, %arg7: memref<1x128xf32, #tpu.memory_space<vmem>>, %arg8: memref<128x128xbf16, #tpu.memory_space<vmem>>, %arg9: memref<32x128xf32, #tpu.memory_space<vmem>>, %arg10: memref<32x128xbf16, #tpu.memory_space<vmem>>, %arg11: memref<32x128xbf16, #tpu.memory_space<vmem>>) attributes {dimension_semantics = [#tpu.dimension_semantics<parallel>], iteration_bounds = array<i64: 2>, scalar_prefetch = 0 : i64, scratch_operands = 2 : i64, tpu.core_type = #tpu.core_type<tc>, window_params = [{transform_indices = @transform_0, window_bounds = array<i64: 32, 32>}, {pipeline_mode = #tpu.pipeline_mode<synchronous>, transform_indices = @transform_1, window_bounds = array<i64: 32, 128>}, {pipeline_mode = #tpu.pipeline_mode<synchronous>, transform_indices = @transform_2, window_bounds = array<i64: 1, 128>}, {pipeline_mode = #tpu.pipeline_mode<synchronous>, transform_indices = @transform_3, window_bounds = array<i64: 1, 128>}, {pipeline_mode = #tpu.pipeline_mode<synchronous>, transform_indices = @transform_4, window_bounds = array<i64: 128, 128>}, {pipeline_mode = #tpu.pipeline_mode<synchronous>, transform_indices = @transform_5, window_bounds = array<i64: 1, 128>}, {pipeline_mode = #tpu.pipeline_mode<synchronous>, transform_indices = @transform_6, window_bounds = array<i64: 1, 128>}, {pipeline_mode = #tpu.pipeline_mode<synchronous>, transform_indices = @transform_7, window_bounds = array<i64: 128, 128>}, {transform_indices = @transform_8, window_bounds = array<i64: 32, 128>}]} {
    %c0 = arith.constant 0 : index
    %c0_0 = arith.constant 0 : index
    %0 = vector.load %arg1[%c0, %c0_0] : memref<32x32xf32, #tpu.memory_space<vmem>>, vector<32x32xf32>
    %1 = arith.truncf %0 : vector<32x32xf32> to vector<32x32xbf16>
    %c0_1 = arith.constant 0 : index
    %c0_2 = arith.constant 0 : index
    %2 = vector.load %arg2[%c0_1, %c0_2] : memref<32x128xbf16, #tpu.memory_space<vmem>>, vector<32x128xbf16>
    %cst = arith.constant dense<0.000000e+00> : vector<32x128xf32>
    %3 = tpu.matmul %1, %2, %cst {dimension_numbers = #tpu.dot_dimension_numbers<[1], [0], [0], [1], [0, 0, 1, 1], [], []>} : vector<32x32xbf16>, vector<32x128xbf16>, vector<32x128xf32> -> vector<32x128xf32>
    %c0_3 = arith.constant 0 : index
    %c0_4 = arith.constant 0 : index
    %4 = vector.load %arg3[%c0_3, %c0_4] : memref<1x128xf32, #tpu.memory_space<vmem>>, vector<1x128xf32>
    %c0_5 = arith.constant 0 : index
    %c0_6 = arith.constant 0 : index
    %5 = vector.load %arg4[%c0_5, %c0_6] : memref<1x128xf32, #tpu.memory_space<vmem>>, vector<1x128xf32>
    %cst_7 = arith.constant dense<0.000000e+00> : vector<32xf32>
    %6 = vector.multi_reduction <add>, %3, %cst_7 [1] : vector<32x128xf32> to vector<32xf32>
    %7 = vector.shape_cast %6 : vector<32xf32> to vector<32x1xf32>
    %cst_8 = arith.constant 1.562500e-02 : f32
    %8 = vector.broadcast %cst_8 : f32 to vector<32x1xf32>
    %9 = arith.mulf %7, %8 : vector<32x1xf32>
    %10 = vector.broadcast %9 : vector<32x1xf32> to vector<32x128xf32>
    %11 = arith.subf %3, %10 : vector<32x128xf32>
    %12 = arith.mulf %11, %11 : vector<32x128xf32>
    %cst_9 = arith.constant dense<0.000000e+00> : vector<32xf32>
    %13 = vector.multi_reduction <add>, %12, %cst_9 [1] : vector<32x128xf32> to vector<32xf32>
    %14 = vector.shape_cast %13 : vector<32xf32> to vector<32x1xf32>
    %15 = arith.mulf %9, %9 : vector<32x1xf32>
    %cst_10 = arith.constant 6.400000e+01 : f32
    %16 = vector.broadcast %cst_10 : f32 to vector<32x1xf32>
    %17 = arith.mulf %16, %15 : vector<32x1xf32>
    %18 = arith.subf %14, %17 : vector<32x1xf32>
    %cst_11 = arith.constant 1.562500e-02 : f32
    %19 = vector.broadcast %cst_11 : f32 to vector<32x1xf32>
    %20 = arith.mulf %18, %19 : vector<32x1xf32>
    %cst_12 = arith.constant 0.000000e+00 : f32
    %21 = vector.broadcast %cst_12 : f32 to vector<32x1xf32>
    %22 = arith.maximumf %20, %21 : vector<32x1xf32>
    %cst_13 = arith.constant 9.99999974E-6 : f32
    %23 = vector.broadcast %cst_13 : f32 to vector<32x1xf32>
    %24 = arith.addf %22, %23 : vector<32x1xf32>
    %25 = math.rsqrt %24 : vector<32x1xf32>
    %26 = vector.broadcast %25 : vector<32x1xf32> to vector<32x128xf32>
    %27 = arith.mulf %11, %26 : vector<32x128xf32>
    %28 = vector.broadcast %4 : vector<1x128xf32> to vector<32x128xf32>
    %29 = arith.mulf %27, %28 : vector<32x128xf32>
    %30 = vector.broadcast %5 : vector<1x128xf32> to vector<32x128xf32>
    %31 = arith.addf %29, %30 : vector<32x128xf32>
    %cst_14 = arith.constant 0.000000e+00 : f32
    %32 = vector.broadcast %cst_14 : f32 to vector<32x128xf32>
    %33 = arith.maximumf %31, %32 : vector<32x128xf32>
    %34 = arith.truncf %33 : vector<32x128xf32> to vector<32x128xbf16>
    %c0_15 = arith.constant 0 : index
    %c0_16 = arith.constant 0 : index
    %35 = vector.load %arg10[%c0_15, %c0_16] : memref<32x128xbf16, #tpu.memory_space<vmem>>, vector<32x128xbf16>
    tpu.vector_store %arg10[%c0_15, %c0_16], %34 {strides = array<i32>} : memref<32x128xbf16, #tpu.memory_space<vmem>>, vector<32x128xbf16>,
    %c0_17 = arith.constant 0 : index
    %c0_18 = arith.constant 0 : index
    %36 = vector.load %arg10[%c0_17, %c0_18] : memref<32x128xbf16, #tpu.memory_space<vmem>>, vector<32x128xbf16>
    %c0_19 = arith.constant 0 : index
    %c0_20 = arith.constant 0 : index
    %37 = vector.load %arg5[%c0_19, %c0_20] : memref<128x128xbf16, #tpu.memory_space<vmem>>, vector<128x128xbf16>
    %cst_21 = arith.constant dense<0.000000e+00> : vector<32x128xf32>
    %38 = tpu.matmul %36, %37, %cst_21 {dimension_numbers = #tpu.dot_dimension_numbers<[1], [0], [0], [1], [0, 0, 1, 1], [], []>} : vector<32x128xbf16>, vector<128x128xbf16>, vector<32x128xf32> -> vector<32x128xf32>
    %c0_22 = arith.constant 0 : index
    %c0_23 = arith.constant 0 : index
    %39 = vector.load %arg6[%c0_22, %c0_23] : memref<1x128xf32, #tpu.memory_space<vmem>>, vector<1x128xf32>
    %c0_24 = arith.constant 0 : index
    %c0_25 = arith.constant 0 : index
    %40 = vector.load %arg7[%c0_24, %c0_25] : memref<1x128xf32, #tpu.memory_space<vmem>>, vector<1x128xf32>
    %cst_26 = arith.constant dense<0.000000e+00> : vector<32xf32>
    %41 = vector.multi_reduction <add>, %38, %cst_26 [1] : vector<32x128xf32> to vector<32xf32>
    %42 = vector.shape_cast %41 : vector<32xf32> to vector<32x1xf32>
    %cst_27 = arith.constant 3.125000e-02 : f32
    %43 = vector.broadcast %cst_27 : f32 to vector<32x1xf32>
    %44 = arith.mulf %42, %43 : vector<32x1xf32>
    %45 = vector.broadcast %44 : vector<32x1xf32> to vector<32x128xf32>
    %46 = arith.subf %38, %45 : vector<32x128xf32>
    %47 = arith.mulf %46, %46 : vector<32x128xf32>
    %cst_28 = arith.constant dense<0.000000e+00> : vector<32xf32>
    %48 = vector.multi_reduction <add>, %47, %cst_28 [1] : vector<32x128xf32> to vector<32xf32>
    %49 = vector.shape_cast %48 : vector<32xf32> to vector<32x1xf32>
    %50 = arith.mulf %44, %44 : vector<32x1xf32>
    %cst_29 = arith.constant 9.600000e+01 : f32
    %51 = vector.broadcast %cst_29 : f32 to vector<32x1xf32>
    %52 = arith.mulf %51, %50 : vector<32x1xf32>
    %53 = arith.subf %49, %52 : vector<32x1xf32>
    %cst_30 = arith.constant 3.125000e-02 : f32
    %54 = vector.broadcast %cst_30 : f32 to vector<32x1xf32>
    %55 = arith.mulf %53, %54 : vector<32x1xf32>
    %cst_31 = arith.constant 0.000000e+00 : f32
    %56 = vector.broadcast %cst_31 : f32 to vector<32x1xf32>
    %57 = arith.maximumf %55, %56 : vector<32x1xf32>
    %cst_32 = arith.constant 9.99999974E-6 : f32
    %58 = vector.broadcast %cst_32 : f32 to vector<32x1xf32>
    %59 = arith.addf %57, %58 : vector<32x1xf32>
    %60 = math.rsqrt %59 : vector<32x1xf32>
    %61 = vector.broadcast %60 : vector<32x1xf32> to vector<32x128xf32>
    %62 = arith.mulf %46, %61 : vector<32x128xf32>
    %63 = vector.broadcast %39 : vector<1x128xf32> to vector<32x128xf32>
    %64 = arith.mulf %62, %63 : vector<32x128xf32>
    %65 = vector.broadcast %40 : vector<1x128xf32> to vector<32x128xf32>
    %66 = arith.addf %64, %65 : vector<32x128xf32>
    %cst_33 = arith.constant 0.000000e+00 : f32
    %67 = vector.broadcast %cst_33 : f32 to vector<32x128xf32>
    %68 = arith.maximumf %66, %67 : vector<32x128xf32>
    %69 = arith.truncf %68 : vector<32x128xf32> to vector<32x128xbf16>
    %c0_34 = arith.constant 0 : index
    %c0_35 = arith.constant 0 : index
    %70 = vector.load %arg11[%c0_34, %c0_35] : memref<32x128xbf16, #tpu.memory_space<vmem>>, vector<32x128xbf16>
    tpu.vector_store %arg11[%c0_34, %c0_35], %69 {strides = array<i32>} : memref<32x128xbf16, #tpu.memory_space<vmem>>, vector<32x128xbf16>,
    %c0_36 = arith.constant 0 : index
    %c0_37 = arith.constant 0 : index
    %71 = vector.load %arg11[%c0_36, %c0_37] : memref<32x128xbf16, #tpu.memory_space<vmem>>, vector<32x128xbf16>
    %c0_38 = arith.constant 0 : index
    %c0_39 = arith.constant 0 : index
    %72 = vector.load %arg8[%c0_38, %c0_39] : memref<128x128xbf16, #tpu.memory_space<vmem>>, vector<128x128xbf16>
    %cst_40 = arith.constant dense<0.000000e+00> : vector<32x128xf32>
    %73 = tpu.matmul %71, %72, %cst_40 {dimension_numbers = #tpu.dot_dimension_numbers<[1], [0], [0], [1], [0, 0, 1, 1], [], []>} : vector<32x128xbf16>, vector<128x128xbf16>, vector<32x128xf32> -> vector<32x128xf32>
    %cst_41 = arith.constant 0.000000e+00 : f32
    %74 = vector.broadcast %cst_41 : f32 to vector<32x128xf32>
    %75 = arith.maximumf %73, %74 : vector<32x128xf32>
    %c0_42 = arith.constant 0 : index
    %c0_43 = arith.constant 0 : index
    %76 = vector.load %arg9[%c0_42, %c0_43] : memref<32x128xf32, #tpu.memory_space<vmem>>, vector<32x128xf32>
    tpu.vector_store %arg9[%c0_42, %c0_43], %75 {strides = array<i32>} : memref<32x128xf32, #tpu.memory_space<vmem>>, vector<32x128xf32>,
    return
  }
  func.func @transform_0(%arg0: i32) -> (i32, i32) {
    %c0_i32 = arith.constant 0 : i32
    %c0_i32_0 = arith.constant 0 : i32
    return %arg0, %c0_i32 : i32, i32
  }
  func.func @transform_1(%arg0: i32) -> (i32, i32) {
    %c0_i32 = arith.constant 0 : i32
    %c0_i32_0 = arith.constant 0 : i32
    %c0_i32_1 = arith.constant 0 : i32
    return %c0_i32, %c0_i32_0 : i32, i32
  }
  func.func @transform_2(%arg0: i32) -> (i32, i32) {
    %c0_i32 = arith.constant 0 : i32
    %c0_i32_0 = arith.constant 0 : i32
    %c0_i32_1 = arith.constant 0 : i32
    return %c0_i32, %c0_i32_0 : i32, i32
  }
  func.func @transform_3(%arg0: i32) -> (i32, i32) {
    %c0_i32 = arith.constant 0 : i32
    %c0_i32_0 = arith.constant 0 : i32
    %c0_i32_1 = arith.constant 0 : i32
    return %c0_i32, %c0_i32_0 : i32, i32
  }
  func.func @transform_4(%arg0: i32) -> (i32, i32) {
    %c0_i32 = arith.constant 0 : i32
    %c0_i32_0 = arith.constant 0 : i32
    %c0_i32_1 = arith.constant 0 : i32
    return %c0_i32, %c0_i32_0 : i32, i32
  }
  func.func @transform_5(%arg0: i32) -> (i32, i32) {
    %c0_i32 = arith.constant 0 : i32
    %c0_i32_0 = arith.constant 0 : i32
    %c0_i32_1 = arith.constant 0 : i32
    return %c0_i32, %c0_i32_0 : i32, i32
  }
  func.func @transform_6(%arg0: i32) -> (i32, i32) {
    %c0_i32 = arith.constant 0 : i32
    %c0_i32_0 = arith.constant 0 : i32
    %c0_i32_1 = arith.constant 0 : i32
    return %c0_i32, %c0_i32_0 : i32, i32
  }
  func.func @transform_7(%arg0: i32) -> (i32, i32) {
    %c0_i32 = arith.constant 0 : i32
    %c0_i32_0 = arith.constant 0 : i32
    %c0_i32_1 = arith.constant 0 : i32
    return %c0_i32, %c0_i32_0 : i32, i32
  }
  func.func @transform_8(%arg0: i32) -> (i32, i32) {
    %c0_i32 = arith.constant 0 : i32
    %c0_i32_0 = arith.constant 0 : i32
    return %arg0, %c0_i32 : i32, i32
  }
}

module attributes {stable_mosaic.version = 11 : i64} {
  func.func @mlp_kernel(%arg0: i32, %arg1: memref<32x32xf32, #tpu.memory_space<vmem>>, %arg2: memref<32x128xbf16, #tpu.memory_space<vmem>>, %arg3: memref<1x128xf32, #tpu.memory_space<vmem>>, %arg4: memref<1x128xf32, #tpu.memory_space<vmem>>, %arg5: memref<128x128xbf16, #tpu.memory_space<vmem>>, %arg6: memref<1x128xf32, #tpu.memory_space<vmem>>, %arg7: memref<1x128xf32, #tpu.memory_space<vmem>>, %arg8: memref<128x128xbf16, #tpu.memory_space<vmem>>, %arg9: memref<32x128xf32, #tpu.memory_space<vmem>>, %arg10: memref<32x128xbf16, #tpu.memory_space<vmem>>, %arg11: memref<32x128xbf16, #tpu.memory_space<vmem>>) attributes {dimension_semantics = [#tpu.dimension_semantics<parallel>], iteration_bounds = array<i64: 2>, scalar_prefetch = 0 : i64, scratch_operands = 2 : i64, tpu.core_type = #tpu.core_type<tc>, window_params = [{transform_indices = @transform_0, window_bounds = array<i64: 32, 32>}, {pipeline_mode = #tpu.pipeline_mode<synchronous>, transform_indices = @transform_1, window_bounds = array<i64: 32, 128>}, {pipeline_mode = #tpu.pipeline_mode<synchronous>, transform_indices = @transform_2, window_bounds = array<i64: 1, 128>}, {pipeline_mode = #tpu.pipeline_mode<synchronous>, transform_indices = @transform_3, window_bounds = array<i64: 1, 128>}, {pipeline_mode = #tpu.pipeline_mode<synchronous>, transform_indices = @transform_4, window_bounds = array<i64: 128, 128>}, {pipeline_mode = #tpu.pipeline_mode<synchronous>, transform_indices = @transform_5, window_bounds = array<i64: 1, 128>}, {pipeline_mode = #tpu.pipeline_mode<synchronous>, transform_indices = @transform_6, window_bounds = array<i64: 1, 128>}, {pipeline_mode = #tpu.pipeline_mode<synchronous>, transform_indices = @transform_7, window_bounds = array<i64: 128, 128>}, {transform_indices = @transform_8, window_bounds = array<i64: 32, 128>}]} {
    %c0 = arith.constant 0 : index
    %c0_0 = arith.constant 0 : index
    %0 = vector.load %arg1[%c0, %c0_0] : memref<32x32xf32, #tpu.memory_space<vmem>>, vector<32x32xf32>
    %1 = arith.truncf %0 : vector<32x32xf32> to vector<32x32xbf16>
    %c0_1 = arith.constant 0 : index
    %c0_2 = arith.constant 0 : index
    %2 = vector.load %arg2[%c0_1, %c0_2] : memref<32x128xbf16, #tpu.memory_space<vmem>>, vector<32x128xbf16>
    %cst = arith.constant dense<0.000000e+00> : vector<32x128xf32>
    %3 = tpu.matmul %1, %2, %cst {dimension_numbers = #tpu.dot_dimension_numbers<[1], [0], [0], [1], [0, 0, 1, 1], [], []>} : vector<32x32xbf16>, vector<32x128xbf16>, vector<32x128xf32> -> vector<32x128xf32>
    %c0_3 = arith.constant 0 : index
    %c0_4 = arith.constant 0 : index
    %4 = vector.load %arg3[%c0_3, %c0_4] : memref<1x128xf32, #tpu.memory_space<vmem>>, vector<1x128xf32>
    %c0_5 = arith.constant 0 : index
    %c0_6 = arith.constant 0 : index
    %5 = vector.load %arg4[%c0_5, %c0_6] : memref<1x128xf32, #tpu.memory_space<vmem>>, vector<1x128xf32>
    %cst_7 = arith.constant dense<0.000000e+00> : vector<32xf32>
    %6 = vector.multi_reduction <add>, %3, %cst_7 [1] : vector<32x128xf32> to vector<32xf32>
    %7 = vector.shape_cast %6 : vector<32xf32> to vector<32x1xf32>
    %cst_8 = arith.constant 1.562500e-02 : f32
    %8 = vector.broadcast %cst_8 : f32 to vector<32x1xf32>
    %9 = arith.mulf %7, %8 : vector<32x1xf32>
    %10 = vector.broadcast %9 : vector<32x1xf32> to vector<32x128xf32>
    %11 = arith.subf %3, %10 : vector<32x128xf32>
    %12 = arith.mulf %11, %11 : vector<32x128xf32>
    %cst_9 = arith.constant dense<0.000000e+00> : vector<32xf32>
    %13 = vector.multi_reduction <add>, %12, %cst_9 [1] : vector<32x128xf32> to vector<32xf32>
    %14 = vector.shape_cast %13 : vector<32xf32> to vector<32x1xf32>
    %15 = arith.mulf %9, %9 : vector<32x1xf32>
    %cst_10 = arith.constant 6.400000e+01 : f32
    %16 = vector.broadcast %cst_10 : f32 to vector<32x1xf32>
    %17 = arith.mulf %16, %15 : vector<32x1xf32>
    %18 = arith.subf %14, %17 : vector<32x1xf32>
    %cst_11 = arith.constant 1.562500e-02 : f32
    %19 = vector.broadcast %cst_11 : f32 to vector<32x1xf32>
    %20 = arith.mulf %18, %19 : vector<32x1xf32>
    %cst_12 = arith.constant 0.000000e+00 : f32
    %21 = vector.broadcast %cst_12 : f32 to vector<32x1xf32>
    %22 = arith.maximumf %20, %21 : vector<32x1xf32>
    %cst_13 = arith.constant 9.99999974E-6 : f32
    %23 = vector.broadcast %cst_13 : f32 to vector<32x1xf32>
    %24 = arith.addf %22, %23 : vector<32x1xf32>
    %25 = math.rsqrt %24 : vector<32x1xf32>
    %26 = vector.broadcast %25 : vector<32x1xf32> to vector<32x128xf32>
    %27 = arith.mulf %11, %26 : vector<32x128xf32>
    %28 = vector.broadcast %4 : vector<1x128xf32> to vector<32x128xf32>
    %29 = arith.mulf %27, %28 : vector<32x128xf32>
    %30 = vector.broadcast %5 : vector<1x128xf32> to vector<32x128xf32>
    %31 = arith.addf %29, %30 : vector<32x128xf32>
    %cst_14 = arith.constant 0.000000e+00 : f32
    %32 = vector.broadcast %cst_14 : f32 to vector<32x128xf32>
    %33 = arith.maximumf %31, %32 : vector<32x128xf32>
    %34 = arith.truncf %33 : vector<32x128xf32> to vector<32x128xbf16>
    %c0_15 = arith.constant 0 : index
    %c0_16 = arith.constant 0 : index
    %35 = vector.load %arg10[%c0_15, %c0_16] : memref<32x128xbf16, #tpu.memory_space<vmem>>, vector<32x128xbf16>
    tpu.vector_store %arg10[%c0_15, %c0_16], %34 {strides = array<i32>} : memref<32x128xbf16, #tpu.memory_space<vmem>>, vector<32x128xbf16>,
    %c0_17 = arith.constant 0 : index
    %c0_18 = arith.constant 0 : index
    %36 = vector.load %arg10[%c0_17, %c0_18] : memref<32x128xbf16, #tpu.memory_space<vmem>>, vector<32x128xbf16>
    %c0_19 = arith.constant 0 : index
    %c0_20 = arith.constant 0 : index
    %37 = vector.load %arg5[%c0_19, %c0_20] : memref<128x128xbf16, #tpu.memory_space<vmem>>, vector<128x128xbf16>
    %cst_21 = arith.constant dense<0.000000e+00> : vector<32x128xf32>
    %38 = tpu.matmul %36, %37, %cst_21 {dimension_numbers = #tpu.dot_dimension_numbers<[1], [0], [0], [1], [0, 0, 1, 1], [], []>} : vector<32x128xbf16>, vector<128x128xbf16>, vector<32x128xf32> -> vector<32x128xf32>
    %c0_22 = arith.constant 0 : index
    %c0_23 = arith.constant 0 : index
    %39 = vector.load %arg6[%c0_22, %c0_23] : memref<1x128xf32, #tpu.memory_space<vmem>>, vector<1x128xf32>
    %c0_24 = arith.constant 0 : index
    %c0_25 = arith.constant 0 : index
    %40 = vector.load %arg7[%c0_24, %c0_25] : memref<1x128xf32, #tpu.memory_space<vmem>>, vector<1x128xf32>
    %cst_26 = arith.constant dense<0.000000e+00> : vector<32xf32>
    %41 = vector.multi_reduction <add>, %38, %cst_26 [1] : vector<32x128xf32> to vector<32xf32>
    %42 = vector.shape_cast %41 : vector<32xf32> to vector<32x1xf32>
    %cst_27 = arith.constant 3.125000e-02 : f32
    %43 = vector.broadcast %cst_27 : f32 to vector<32x1xf32>
    %44 = arith.mulf %42, %43 : vector<32x1xf32>
    %45 = vector.broadcast %44 : vector<32x1xf32> to vector<32x128xf32>
    %46 = arith.subf %38, %45 : vector<32x128xf32>
    %47 = arith.mulf %46, %46 : vector<32x128xf32>
    %cst_28 = arith.constant dense<0.000000e+00> : vector<32xf32>
    %48 = vector.multi_reduction <add>, %47, %cst_28 [1] : vector<32x128xf32> to vector<32xf32>
    %49 = vector.shape_cast %48 : vector<32xf32> to vector<32x1xf32>
    %50 = arith.mulf %44, %44 : vector<32x1xf32>
    %cst_29 = arith.constant 9.600000e+01 : f32
    %51 = vector.broadcast %cst_29 : f32 to vector<32x1xf32>
    %52 = arith.mulf %51, %50 : vector<32x1xf32>
    %53 = arith.subf %49, %52 : vector<32x1xf32>
    %cst_30 = arith.constant 3.125000e-02 : f32
    %54 = vector.broadcast %cst_30 : f32 to vector<32x1xf32>
    %55 = arith.mulf %53, %54 : vector<32x1xf32>
    %cst_31 = arith.constant 0.000000e+00 : f32
    %56 = vector.broadcast %cst_31 : f32 to vector<32x1xf32>
    %57 = arith.maximumf %55, %56 : vector<32x1xf32>
    %cst_32 = arith.constant 9.99999974E-6 : f32
    %58 = vector.broadcast %cst_32 : f32 to vector<32x1xf32>
    %59 = arith.addf %57, %58 : vector<32x1xf32>
    %60 = math.rsqrt %59 : vector<32x1xf32>
    %61 = vector.broadcast %60 : vector<32x1xf32> to vector<32x128xf32>
    %62 = arith.mulf %46, %61 : vector<32x128xf32>
    %63 = vector.broadcast %39 : vector<1x128xf32> to vector<32x128xf32>
    %64 = arith.mulf %62, %63 : vector<32x128xf32>
    %65 = vector.broadcast %40 : vector<1x128xf32> to vector<32x128xf32>
    %66 = arith.addf %64, %65 : vector<32x128xf32>
    %cst_33 = arith.constant 0.000000e+00 : f32
    %67 = vector.broadcast %cst_33 : f32 to vector<32x128xf32>
    %68 = arith.maximumf %66, %67 : vector<32x128xf32>
    %69 = arith.truncf %68 : vector<32x128xf32> to vector<32x128xbf16>
    %c0_34 = arith.constant 0 : index
    %c0_35 = arith.constant 0 : index
    %70 = vector.load %arg11[%c0_34, %c0_35] : memref<32x128xbf16, #tpu.memory_space<vmem>>, vector<32x128xbf16>
    tpu.vector_store %arg11[%c0_34, %c0_35], %69 {strides = array<i32>} : memref<32x128xbf16, #tpu.memory_space<vmem>>, vector<32x128xbf16>,
    %c0_36 = arith.constant 0 : index
    %c0_37 = arith.constant 0 : index
    %71 = vector.load %arg11[%c0_36, %c0_37] : memref<32x128xbf16, #tpu.memory_space<vmem>>, vector<32x128xbf16>
    %c0_38 = arith.constant 0 : index
    %c0_39 = arith.constant 0 : index
    %72 = vector.load %arg8[%c0_38, %c0_39] : memref<128x128xbf16, #tpu.memory_space<vmem>>, vector<128x128xbf16>
    %cst_40 = arith.constant dense<0.000000e+00> : vector<32x128xf32>
    %73 = tpu.matmul %71, %72, %cst_40 {dimension_numbers = #tpu.dot_dimension_numbers<[1], [0], [0], [1], [0, 0, 1, 1], [], []>} : vector<32x128xbf16>, vector<128x128xbf16>, vector<32x128xf32> -> vector<32x128xf32>
    %cst_41 = arith.constant 0.000000e+00 : f32
    %74 = vector.broadcast %cst_41 : f32 to vector<32x128xf32>
    %75 = arith.maximumf %73, %74 : vector<32x128xf32>
    %c0_42 = arith.constant 0 : index
    %c0_43 = arith.constant 0 : index
    %76 = vector.load %arg9[%c0_42, %c0_43] : memref<32x128xf32, #tpu.memory_space<vmem>>, vector<32x128xf32>
    tpu.vector_store %arg9[%c0_42, %c0_43], %75 {strides = array<i32>} : memref<32x128xf32, #tpu.memory_space<vmem>>, vector<32x128xf32>,
    return
  }
  func.func @transform_0(%arg0: i32) -> (i32, i32) {
    %c0_i32 = arith.constant 0 : i32
    %c0_i32_0 = arith.constant 0 : i32
    return %arg0, %c0_i32 : i32, i32
  }
  func.func @transform_1(%arg0: i32) -> (i32, i32) {
    %c0_i32 = arith.constant 0 : i32
    %c0_i32_0 = arith.constant 0 : i32
    %c0_i32_1 = arith.constant 0 : i32
    return %c0_i32, %c0_i32_0 : i32, i32
  }
  func.func @transform_2(%arg0: i32) -> (i32, i32) {
    %c0_i32 = arith.constant 0 : i32
    %c0_i32_0 = arith.constant 0 : i32
    %c0_i32_1 = arith.constant 0 : i32
    return %c0_i32, %c0_i32_0 : i32, i32
  }
  func.func @transform_3(%arg0: i32) -> (i32, i32) {
    %c0_i32 = arith.constant 0 : i32
    %c0_i32_0 = arith.constant 0 : i32
    %c0_i32_1 = arith.constant 0 : i32
    return %c0_i32, %c0_i32_0 : i32, i32
  }
  func.func @transform_4(%arg0: i32) -> (i32, i32) {
    %c0_i32 = arith.constant 0 : i32
    %c0_i32_0 = arith.constant 0 : i32
    %c0_i32_1 = arith.constant 0 : i32
    return %c0_i32, %c0_i32_0 : i32, i32
  }
  func.func @transform_5(%arg0: i32) -> (i32, i32) {
    %c0_i32 = arith.constant 0 : i32
    %c0_i32_0 = arith.constant 0 : i32
    %c0_i32_1 = arith.constant 0 : i32
    return %c0_i32, %c0_i32_0 : i32, i32
  }
  func.func @transform_6(%arg0: i32) -> (i32, i32) {
    %c0_i32 = arith.constant 0 : i32
    %c0_i32_0 = arith.constant 0 : i32
    %c0_i32_1 = arith.constant 0 : i32
    return %c0_i32, %c0_i32_0 : i32, i32
  }
  func.func @transform_7(%arg0: i32) -> (i32, i32) {
    %c0_i32 = arith.constant 0 : i32
    %c0_i32_0 = arith.constant 0 : i32
    %c0_i32_1 = arith.constant 0 : i32
    return %c0_i32, %c0_i32_0 : i32, i32
  }
  func.func @transform_8(%arg0: i32) -> (i32, i32) {
    %c0_i32 = arith.constant 0 : i32
    %c0_i32_0 = arith.constant 0 : i32
    return %arg0, %c0_i32 : i32, i32
  }
}

</mosaic_0001>

<llo_original>
// kernel: tpu_custom_call.1
$region0: #{tpu_custom_call.1}
  #allocation0 [shape = 'u32[]', space=smem, size = 0x4, offset = 0x4, fixed_abs, tag = 'smem constant byte address 0x4 - core index']
  #allocation1 [shape = 'u32[72,128]{1,0:T(1,128)}', space=vmem, size = 0x9000, scoped, tag = 'internal scratch']
  #allocation2 [shape = 'bf16[32,128]{1,0:T(8,128)(2,1)}', space=vmem, size = 0x2000, scoped, tag = 'scratch operand']
  #allocation3 [shape = 'bf16[32,128]{1,0:T(8,128)(2,1)}', space=vmem, size = 0x2000, scoped, tag = 'scratch operand']
  %s0 = inlined_call_operand.vmem [shape: f32[64,32], index: 0, kind: input, shape index: {}]
  %s1 = inlined_call_operand.vmem [shape: bf16[32,128], index: 1, kind: input, shape index: {}]
  %s2 = inlined_call_operand.vmem [shape: f32[1,128], index: 2, kind: input, shape index: {}]
  %s3 = inlined_call_operand.vmem [shape: f32[1,128], index: 3, kind: input, shape index: {}]
  %s4 = inlined_call_operand.vmem [shape: bf16[128,128], index: 4, kind: input, shape index: {}]
  %s5 = inlined_call_operand.vmem [shape: f32[1,128], index: 5, kind: input, shape index: {}]
  %s6 = inlined_call_operand.vmem [shape: f32[1,128], index: 6, kind: input, shape index: {}]
  %s7 = inlined_call_operand.hbm [shape: bf16[128,128], index: 7, kind: input, shape index: {}]
  %s8 = inlined_call_operand.hbm [shape: f32[64,128], index: 8, kind: output, shape index: {}]
  %s9 = sld [smem:[#allocation0]]
  $region69: #{tpu_custom_call.1} parent=0
    _
  %s11 = ssub.s32 1, %s9
  %s12 = scalar_select 0, %s11, %s9
  $region1: #{tpu_custom_call.1} parent=0
    #allocation4 [shape = 'u8[32768]{0}', space=vmem, size = 0x8000, scoped, tag = 'input window, operand 7, single buffered']
    #allocation5 [shape = 's32[2]{0}', space=sflag, size = 0x8, scoped, tag = 'scoped memory for tpu_custom_call.1']
    #allocation6 [shape = 's32[2]{0}', space=sflag, size = 0x8, scoped, tag = 'scoped memory for tpu_custom_call.1']
    #allocation7 [shape = 'u8[32768]{0}', space=vmem, size = 0x8000, scoped, tag = 'output window, operand 0']
    %13 = vsyncpa [#allocation5], 0
    %14 = vsyncpa [#allocation6], 0
    %s15 = scalar_lea.sflag [#allocation6], 1
    %16 = vsyncpa %s15, 0
    loop: start=0, step=1, limit=4
    $region2: #{tpu_custom_call.1} parent=1 // loop_pre_header
      _
    $region3: #{tpu_custom_call.1} parent=1 // loop_header
      %s18 = sphi 0, %s22
      %p19 = scmp.ge.s32.totalorder %s18, 4
      %s28 = sphi 0, %s30
      %s31 = sphi 0, %s28
      %s32 = sphi 0, %s31
      %s48 = sphi 0, %s32
      %s52 = sphi 0, %s52
      %s54 = sphi 0, %s52
      %s55 = sphi 0, %s54
      %s69 = sphi 0, %s55
      %s73 = sphi 0, %s73
      %s75 = sphi 0, %s73
      %s76 = sphi 0, %s75
      %s90 = sphi 0, %s76
      %s94 = sphi 0, %s94
      %s96 = sphi 0, %s94
      %s97 = sphi 0, %s96
      %s111 = sphi 0, %s97
      %s115 = sphi 0, %s115
      %s117 = sphi 0, %s115
      %s118 = sphi 0, %s117
      %s132 = sphi 0, %s118
      %s136 = sphi 0, %s136
      %s138 = sphi 0, %s136
      %s139 = sphi 0, %s138
      %s153 = sphi 0, %s139
      %s157 = sphi 0, %s157
      %s159 = sphi 0, %s157
      %s160 = sphi 0, %s159
      %s174 = sphi 0, %s160
      %s178 = sphi 0, %s178
      %s180 = sphi 0, %s178
      %s181 = sphi 0, %s180
      %s195 = sphi 0, %s181
      %s201 = sphi 0, %s203
      %s204 = sphi 0, %s201
      %s205 = sphi 0, %s204
      %s221 = sphi 0, %s205
    $region4: #{tpu_custom_call.1} parent=1 // loop_header_branch
      %21 = sbr.rel (%p19) target = $region8
    $region5: #{tpu_custom_call.1} parent=1 // loop_body
      %s23 = ssub.s32 %s18, 1
      %s24 = ssub.s32 %s18, 2
      %s25 = sadd.s32 %s18, 1
      %s26 = ssub.s32 %s18, %s25
      %p27 = scmp.eq.s32.totalorder %s26, 0
      %s29 = sadd.s32 %s28, 1
      %s30 = scalar_select %p27, %s28, %s29
      %p33 = pneg %p27
      %p34 = scmp.eq.s32.totalorder %s18, 1
      %p35 = por %p33, %p34
      %p36 = scmp.ne.s32.totalorder %s28, %s31
      %p37 = scmp.eq.s32.totalorder %s18, 0
      %p38 = por %p36, %p37
      %p39 = scmp.ne.s32.totalorder %s28, %s31
      %p40 = scmp.eq.s32.totalorder %s23, 1
      %p41 = por %p39, %p40
      %p42 = scmp.ne.s32.totalorder %s31, %s32
      %p43 = scmp.eq.s32.totalorder %s23, 0
      %p44 = por %p42, %p43
      %p45 = scmp.ne.s32.totalorder %s31, %s32
      %p46 = scmp.eq.s32.totalorder %s24, 1
      %p47 = por %p45, %p46
      %p49 = scmp.ne.s32.totalorder %s32, %s48
      %p50 = scmp.eq.s32.totalorder %s24, 0
      %p51 = por %p49, %p50
      %s53 = sadd.s32 %s52, 1
      %p56 = scmp.eq.s32.totalorder %s18, 1
      %p57 = scmp.ne.s32.totalorder %s52, %s54
      %p58 = scmp.eq.s32.totalorder %s18, 0
      %p59 = por %p57, %p58
      %p60 = scmp.ne.s32.totalorder %s52, %s54
      %p61 = scmp.eq.s32.totalorder %s23, 1
      %p62 = por %p60, %p61
      %p63 = scmp.ne.s32.totalorder %s54, %s55
      %p64 = scmp.eq.s32.totalorder %s23, 0
      %p65 = por %p63, %p64
      %p66 = scmp.ne.s32.totalorder %s54, %s55
      %p67 = scmp.eq.s32.totalorder %s24, 1
      %p68 = por %p66, %p67
      %p70 = scmp.ne.s32.totalorder %s55, %s69
      %p71 = scmp.eq.s32.totalorder %s24, 0
      %p72 = por %p70, %p71
      %s74 = sadd.s32 %s73, 1
      %p77 = scmp.eq.s32.totalorder %s18, 1
      %p78 = scmp.ne.s32.totalorder %s73, %s75
      %p79 = scmp.eq.s32.totalorder %s18, 0
      %p80 = por %p78, %p79
      %p81 = scmp.ne.s32.totalorder %s73, %s75
      %p82 = scmp.eq.s32.totalorder %s23, 1
      %p83 = por %p81, %p82
      %p84 = scmp.ne.s32.totalorder %s75, %s76
      %p85 = scmp.eq.s32.totalorder %s23, 0
      %p86 = por %p84, %p85
      %p87 = scmp.ne.s32.totalorder %s75, %s76
      %p88 = scmp.eq.s32.totalorder %s24, 1
      %p89 = por %p87, %p88
      %p91 = scmp.ne.s32.totalorder %s76, %s90
      %p92 = scmp.eq.s32.totalorder %s24, 0
      %p93 = por %p91, %p92
      %s95 = sadd.s32 %s94, 1
      %p98 = scmp.eq.s32.totalorder %s18, 1
      %p99 = scmp.ne.s32.totalorder %s94, %s96
      %p100 = scmp.eq.s32.totalorder %s18, 0
      %p101 = por %p99, %p100
      %p102 = scmp.ne.s32.totalorder %s94, %s96
      %p103 = scmp.eq.s32.totalorder %s23, 1
      %p104 = por %p102, %p103
      %p105 = scmp.ne.s32.totalorder %s96, %s97
      %p106 = scmp.eq.s32.totalorder %s23, 0
      %p107 = por %p105, %p106
      %p108 = scmp.ne.s32.totalorder %s96, %s97
      %p109 = scmp.eq.s32.totalorder %s24, 1
      %p110 = por %p108, %p109
      %p112 = scmp.ne.s32.totalorder %s97, %s111
      %p113 = scmp.eq.s32.totalorder %s24, 0
      %p114 = por %p112, %p113
      %s116 = sadd.s32 %s115, 1
      %p119 = scmp.eq.s32.totalorder %s18, 1
      %p120 = scmp.ne.s32.totalorder %s115, %s117
      %p121 = scmp.eq.s32.totalorder %s18, 0
      %p122 = por %p120, %p121
      %p123 = scmp.ne.s32.totalorder %s115, %s117
      %p124 = scmp.eq.s32.totalorder %s23, 1
      %p125 = por %p123, %p124
      %p126 = scmp.ne.s32.totalorder %s117, %s118
      %p127 = scmp.eq.s32.totalorder %s23, 0
      %p128 = por %p126, %p127
      %p129 = scmp.ne.s32.totalorder %s117, %s118
      %p130 = scmp.eq.s32.totalorder %s24, 1
      %p131 = por %p129, %p130
      %p133 = scmp.ne.s32.totalorder %s118, %s132
      %p134 = scmp.eq.s32.totalorder %s24, 0
      %p135 = por %p133, %p134
      %s137 = sadd.s32 %s136, 1
      %p140 = scmp.eq.s32.totalorder %s18, 1
      %p141 = scmp.ne.s32.totalorder %s136, %s138
      %p142 = scmp.eq.s32.totalorder %s18, 0
      %p143 = por %p141, %p142
      %p144 = scmp.ne.s32.totalorder %s136, %s138
      %p145 = scmp.eq.s32.totalorder %s23, 1
      %p146 = por %p144, %p145
      %p147 = scmp.ne.s32.totalorder %s138, %s139
      %p148 = scmp.eq.s32.totalorder %s23, 0
      %p149 = por %p147, %p148
      %p150 = scmp.ne.s32.totalorder %s138, %s139
      %p151 = scmp.eq.s32.totalorder %s24, 1
      %p152 = por %p150, %p151
      %p154 = scmp.ne.s32.totalorder %s139, %s153
      %p155 = scmp.eq.s32.totalorder %s24, 0
      %p156 = por %p154, %p155
      %s158 = sadd.s32 %s157, 1
      %p161 = scmp.eq.s32.totalorder %s18, 1
      %p162 = scmp.ne.s32.totalorder %s157, %s159
      %p163 = scmp.eq.s32.totalorder %s18, 0
      %p164 = por %p162, %p163
      %p165 = scmp.ne.s32.totalorder %s157, %s159
      %p166 = scmp.eq.s32.totalorder %s23, 1
      %p167 = por %p165, %p166
      %p168 = scmp.ne.s32.totalorder %s159, %s160
      %p169 = scmp.eq.s32.totalorder %s23, 0
      %p170 = por %p168, %p169
      %p171 = scmp.ne.s32.totalorder %s159, %s160
      %p172 = scmp.eq.s32.totalorder %s24, 1
      %p173 = por %p171, %p172
      %p175 = scmp.ne.s32.totalorder %s160, %s174
      %p176 = scmp.eq.s32.totalorder %s24, 0
      %p177 = por %p175, %p176
      %s179 = sadd.s32 %s178, 1
      %p182 = scmp.eq.s32.totalorder %s18, 1
      %p183 = scmp.ne.s32.totalorder %s178, %s180
      %p184 = scmp.eq.s32.totalorder %s18, 0
      %p185 = por %p183, %p184
      %p186 = scmp.ne.s32.totalorder %s178, %s180
      %p187 = scmp.eq.s32.totalorder %s23, 1
      %p188 = por %p186, %p187
      %p189 = scmp.ne.s32.totalorder %s180, %s181
      %p190 = scmp.eq.s32.totalorder %s23, 0
      %p191 = por %p189, %p190
      %p192 = scmp.ne.s32.totalorder %s180, %s181
      %p193 = scmp.eq.s32.totalorder %s24, 1
      %p194 = por %p192, %p193
      %p196 = scmp.ne.s32.totalorder %s181, %s195
      %p197 = scmp.eq.s32.totalorder %s24, 0
      %p198 = por %p196, %p197
      %s199 = ssub.s32 %s18, %s25
      %p200 = scmp.eq.s32.totalorder %s199, 0
      %s202 = sadd.s32 %s201, 1
      %s203 = scalar_select %p200, %s201, %s202
      %p206 = pneg %p200
      %p207 = scmp.eq.s32.totalorder %s18, 1
      %p208 = por %p206, %p207
      %p209 = scmp.ne.s32.totalorder %s201, %s204
      %p210 = scmp.eq.s32.totalorder %s18, 0
      %p211 = por %p209, %p210
      %p212 = scmp.ne.s32.totalorder %s201, %s204
      %p213 = scmp.eq.s32.totalorder %s23, 1
      %p214 = por %p212, %p213
      %p215 = scmp.ne.s32.totalorder %s204, %s205
      %p216 = scmp.eq.s32.totalorder %s23, 0
      %p217 = por %p215, %p216
      %p218 = scmp.ne.s32.totalorder %s204, %s205
      %p219 = scmp.eq.s32.totalorder %s24, 1
      %p220 = por %p218, %p219
      %p222 = scmp.ne.s32.totalorder %s205, %s221
      %p223 = scmp.eq.s32.totalorder %s24, 0
      %p224 = por %p222, %p223
      %p225 = scmp.le.s32.totalorder 1, %s18
      %p226 = scmp.lt.s32.totalorder %s18, 3
      %p227 = pnand %p225, %p226
      %p228 = pneg %p227
      // Predicated region
      $region9: #{tpu_custom_call.1} parent=5 // pred_check
        _
      $region10: #{tpu_custom_call.1} parent=5 // pred_check_branch
        %230 = sbr.rel (%p227) target = $region12
      $region11: #{tpu_custom_call.1} parent=5 // pred_region
        %s231 = ssub.s32 %s18, 1
        // Predicated region
        $region13: #{tpu_custom_call.1} parent=11 // pred_check
          %p232 = pneg %p65
        $region14: #{tpu_custom_call.1} parent=11 // pred_check_branch
          %234 = sbr.rel (%p232) target = $region16
        $region15: #{tpu_custom_call.1} parent=11 // pred_region
          _
        $region16: #{tpu_custom_call.1} parent=11 // pred_fallthru
          _
        // Predicated region
        $region17: #{tpu_custom_call.1} parent=11 // pred_check
          %p235 = pneg %p86
        $region18: #{tpu_custom_call.1} parent=11 // pred_check_branch
          %237 = sbr.rel (%p235) target = $region20
        $region19: #{tpu_custom_call.1} parent=11 // pred_region
          _
        $region20: #{tpu_custom_call.1} parent=11 // pred_fallthru
          _
        // Predicated region
        $region21: #{tpu_custom_call.1} parent=11 // pred_check
          %p238 = pneg %p107
        $region22: #{tpu_custom_call.1} parent=11 // pred_check_branch
          %240 = sbr.rel (%p238) target = $region24
        $region23: #{tpu_custom_call.1} parent=11 // pred_region
          _
        $region24: #{tpu_custom_call.1} parent=11 // pred_fallthru
          _
        // Predicated region
        $region25: #{tpu_custom_call.1} parent=11 // pred_check
          %p241 = pneg %p128
        $region26: #{tpu_custom_call.1} parent=11 // pred_check_branch
          %243 = sbr.rel (%p241) target = $region28
        $region27: #{tpu_custom_call.1} parent=11 // pred_region
          _
        $region28: #{tpu_custom_call.1} parent=11 // pred_fallthru
          _
        // Predicated region
        $region29: #{tpu_custom_call.1} parent=11 // pred_check
          %p244 = pneg %p149
        $region30: #{tpu_custom_call.1} parent=11 // pred_check_branch
          %246 = sbr.rel (%p244) target = $region32
        $region31: #{tpu_custom_call.1} parent=11 // pred_region
          _
        $region32: #{tpu_custom_call.1} parent=11 // pred_fallthru
          _
        // Predicated region
        $region33: #{tpu_custom_call.1} parent=11 // pred_check
          %p247 = pneg %p170
        $region34: #{tpu_custom_call.1} parent=11 // pred_check_branch
          %249 = sbr.rel (%p247) target = $region36
        $region35: #{tpu_custom_call.1} parent=11 // pred_region
          _
        $region36: #{tpu_custom_call.1} parent=11 // pred_fallthru
          _
        // Predicated region
        $region37: #{tpu_custom_call.1} parent=11 // pred_check
          %p250 = pneg %p191
        $region38: #{tpu_custom_call.1} parent=11 // pred_check_branch
          %252 = sbr.rel (%p250) target = $region40
        $region39: #{tpu_custom_call.1} parent=11 // pred_region
          %254 = vsyncadd [#allocation5], 0
          %s255 = sshll.u32 %s7, 4
          %s256 = int_to_ptr.hbm [resolvable:$true] %s255
          %s257 = sshll.u32 [#allocation4], 4
          %s258 = int_to_ptr.vmem [resolvable:$true] %s257
          %263 = dma.hbm_to_vmem [thread:$0]  %s256, 1024, %s258, [#allocation5], 64, 64, 4
        $region40: #{tpu_custom_call.1} parent=11 // pred_fallthru
          _
      $region12: #{tpu_custom_call.1} parent=5 // pred_fallthru
        _
      %p264 = scmp.lt.s32.totalorder %s18, 2
      // Predicated region
      $region41: #{tpu_custom_call.1} parent=5 // pred_check
        %p265 = pneg %p264
      $region42: #{tpu_custom_call.1} parent=5 // pred_check_branch
        %267 = sbr.rel (%p265) target = $region44
      $region43: #{tpu_custom_call.1} parent=5 // pred_region
        // Predicated region
        $region45: #{tpu_custom_call.1} parent=43 // pred_check
          %p268 = pneg %p38
        $region46: #{tpu_custom_call.1} parent=43 // pred_check_branch
          %270 = sbr.rel (%p268) target = $region48
        $region47: #{tpu_custom_call.1} parent=43 // pred_region
          %s271 = smul.u32 4, %s18
          %p272 = scmp.lt.s32.totalorder %s271, 7
          %s273 = scalar_select %p272, %s271, 7
          %s274 = smul.addr %s273, 8
          %s275 = scalar_lea.vmem %s0, %s274
          %s276 = smul.u32 4, %s18
        $region48: #{tpu_custom_call.1} parent=43 // pred_fallthru
          _
      $region44: #{tpu_custom_call.1} parent=5 // pred_fallthru
        _
      %p277 = scmp.le.s32.totalorder 1, %s18
      %p278 = scmp.lt.s32.totalorder %s18, 3
      %p279 = pnand %p277, %p278
      %p280 = pneg %p279
      // Predicated region
      $region49: #{tpu_custom_call.1} parent=5 // pred_check
        _
      $region50: #{tpu_custom_call.1} parent=5 // pred_check_branch
        %282 = sbr.rel (%p279) target = $region52
      $region51: #{tpu_custom_call.1} parent=5 // pred_region
        %s283 = ssub.s32 %s18, 1
        // Predicated region
        $region53: #{tpu_custom_call.1} parent=51 // pred_check
          %p284 = pneg %p191
        $region54: #{tpu_custom_call.1} parent=51 // pred_check_branch
          %286 = sbr.rel (%p284) target = $region56
        $region55: #{tpu_custom_call.1} parent=51 // pred_region
          %288 = dma.done [#allocation5], 1024
        $region56: #{tpu_custom_call.1} parent=51 // pred_fallthru
          _
        %s289 = smul.u32 4, %s23
        %p290 = scmp.lt.s32.totalorder %s289, 7
        %s291 = scalar_select %p290, %s289, 7
        %s292 = smul.addr %s291, 8
        %s293 = scalar_lea.vmem %s0, %s292
        %p294 = pneg %p44
        %p295 = pneg %p41
        %p296 = pneg %p65
        %p297 = pneg %p62
        %p298 = pneg %p86
        %p299 = pneg %p83
        %p300 = pneg %p107
        %p301 = pneg %p104
        %p302 = pneg %p128
        %p303 = pneg %p125
        %p304 = pneg %p149
        %p305 = pneg %p146
        %p306 = pneg %p170
        %p307 = pneg %p167
        %p308 = pneg %p191
        %p309 = pneg %p188
        %p310 = pneg %p217
        %p311 = pneg %p214
        %s312 = sand.u32 %s204, 1
        %s313 = scalar_lea.sflag [#allocation6], %s312
        %s314 = sand.u32 %s204, 1
        %s315 = smul.addr %s314, 32
        %s316 = scalar_lea.vmem [#allocation7], %s315
        %s317 = smul.u32 4, %s23
        %p318 = scmp.lt.s32.totalorder %s317, 7
        %s319 = scalar_select %p318, %s317, 7
        %s320 = smul.addr %s319, 8
        %s321 = scalar_lea.vmem %s0, %s320
        %s322 = smul.u32 4, %s23
        %s323 = smul.u32 4, %s23
        %v325 = vld [vmem:[%s321] sm:$0xff]
        %v326 = vld [vmem:[%s321 + $0x8] sm:$0xff]
        %v327 = vld [vmem:[%s321 + $0x10] sm:$0xff]
        %v328 = vld [vmem:[%s321 + $0x18] sm:$0xff]
        %v329 = vpack.c.bf16 %v326, %v325
        %v330 = vpack.c.bf16 %v328, %v327
        %v331 = vld [vmem:[%s1] sm:$0xf]
        %v332 = vld [vmem:[%s1 + $0x4] sm:$0xf]
        %v333 = vld [vmem:[%s1 + $0x8] sm:$0xf]
        %v334 = vld [vmem:[%s1 + $0xc] sm:$0xf]
        %v339 = vunpack.c.l.b16 %v331
        %v340 = vunpack.c.l.b16 %v332
        %v341 = vunpack.c.l.b16 %v333
        %v342 = vunpack.c.l.b16 %v334
        %v343 = vpack.c.b16 %v340, %v339
        %v344 = vpack.c.b16 %v342, %v341
        %vm347 = vcmask 261120
        %v349 = vsel %vm347, %v329, 0
        %v352 = vsel %vm347, %v330, 0
        %354 = vmatpush.bf16.msra.mxu0 0
        %355 = vmatpush.bf16.msra.mxu0 0
        %356 = vmatpush.bf16.msra.mxu0 0
        %357 = vmatpush.bf16.msra.mxu0 0
        %358 = vmatpush.bf16.msra.mxu0 0
        %359 = vmatpush.bf16.msra.mxu0 0
        %360 = vmatpush.bf16.msra.mxu0 %v344
        %361 = vmatpush.bf16.msra.mxu0 %v343
        %362 = vmatmul.bf16.gmra.mxu0 %v349
        %v363 = vpop.f32.mrf.mxu0
        %v364 = vadd.f32 0.0, %v363
        %v365 = vpop.f32.mrf.mxu0
        %v366 = vadd.f32 0.0, %v365
        %367 = vmatmul.bf16.gmra.mxu0 %v352
        %v368 = vpop.f32.mrf.mxu0
        %v369 = vadd.f32 0.0, %v368
        %v370 = vpop.f32.mrf.mxu0
        %v371 = vadd.f32 0.0, %v370
        %372 = vdwg.mxu0
        %v373 = vld [vmem:[%s2] sm:$0x1]
        %v374 = vld [vmem:[%s3] sm:$0x1]
        %375 = vadd.xlane.f32.xlu0 %v364
        %v376 = vpop.xlane.xlu0 %375
        %377 = vadd.xlane.f32.xlu0 %v366
        %v378 = vpop.xlane.xlu0 %377
        %379 = vadd.xlane.f32.xlu0 %v369
        %v380 = vpop.xlane.xlu0 %379
        %381 = vadd.xlane.f32.xlu0 %v371
        %v382 = vpop.xlane.xlu0 %381
        %v383 = vmul.f32 %v376, 0.015625
        %v384 = vmul.f32 %v378, 0.015625
        %v385 = vmul.f32 %v380, 0.015625
        %v386 = vmul.f32 %v382, 0.015625
        %v387 = vsub.f32 %v364, %v383
        %v388 = vsub.f32 %v366, %v384
        %v389 = vsub.f32 %v369, %v385
        %v390 = vsub.f32 %v371, %v386
        %v391 = vmul.f32 %v387, %v387
        %v392 = vmul.f32 %v388, %v388
        %v393 = vmul.f32 %v389, %v389
        %v394 = vmul.f32 %v390, %v390
        %395 = vadd.xlane.f32.xlu0 %v391
        %v396 = vpop.xlane.xlu0 %395
        %397 = vadd.xlane.f32.xlu0 %v392
        %v398 = vpop.xlane.xlu0 %397
        %399 = vadd.xlane.f32.xlu0 %v393
        %v400 = vpop.xlane.xlu0 %399
        %401 = vadd.xlane.f32.xlu0 %v394
        %v402 = vpop.xlane.xlu0 %401
        %v403 = vmul.f32 %v383, %v383
        %v404 = vmul.f32 %v384, %v384
        %v405 = vmul.f32 %v385, %v385
        %v406 = vmul.f32 %v386, %v386
        %v407 = vmul.f32 %v403, 64.0
        %v408 = vmul.f32 %v404, 64.0
        %v409 = vmul.f32 %v405, 64.0
        %v410 = vmul.f32 %v406, 64.0
        %v411 = vsub.f32 %v396, %v407
        %v412 = vsub.f32 %v398, %v408
        %v413 = vsub.f32 %v400, %v409
        %v414 = vsub.f32 %v402, %v410
        %v415 = vmul.f32 %v411, 0.015625
        %v416 = vmul.f32 %v412, 0.015625
        %v417 = vmul.f32 %v413, 0.015625
        %v418 = vmul.f32 %v414, 0.015625
        %v419 = vmax.f32 %v415, 0.0
        %v420 = vmax.f32 %v416, 0.0
        %v421 = vmax.f32 %v417, 0.0
        %v422 = vmax.f32 %v418, 0.0
        %v423 = vadd.f32 %v419, 1e-05
        %v424 = vadd.f32 %v420, 1e-05
        %v425 = vadd.f32 %v421, 1e-05
        %v426 = vadd.f32 %v422, 1e-05
        %v427 = vrsqrt.pop %v423
        %v428 = vmul.f32 %v427, %v423
        %v429 = vmul.f32 %v428, %v427
        %v430 = vmul.f32 0.5, %v429
        %v431 = vsub.f32 1.5, %v430
        %v432 = vmul.f32 %v427, %v431
        %vm433 = vweird.f32 %v423
        %vm434 = vweird.f32 %v427
        %vm435 = vmor %vm433, %vm434
        %v436 = vsel %vm435, %v427, %v432
        %v437 = vrsqrt.pop %v424
        %v438 = vmul.f32 %v437, %v424
        %v439 = vmul.f32 %v438, %v437
        %v440 = vmul.f32 0.5, %v439
        %v441 = vsub.f32 1.5, %v440
        %v442 = vmul.f32 %v437, %v441
        %vm443 = vweird.f32 %v424
        %vm444 = vweird.f32 %v437
        %vm445 = vmor %vm443, %vm444
        %v446 = vsel %vm445, %v437, %v442
        %v447 = vrsqrt.pop %v425
        %v448 = vmul.f32 %v447, %v425
        %v449 = vmul.f32 %v448, %v447
        %v450 = vmul.f32 0.5, %v449
        %v451 = vsub.f32 1.5, %v450
        %v452 = vmul.f32 %v447, %v451
        %vm453 = vweird.f32 %v425
        %vm454 = vweird.f32 %v447
        %vm455 = vmor %vm453, %vm454
        %v456 = vsel %vm455, %v447, %v452
        %v457 = vrsqrt.pop %v426
        %v458 = vmul.f32 %v457, %v426
        %v459 = vmul.f32 %v458, %v457
        %v460 = vmul.f32 0.5, %v459
        %v461 = vsub.f32 1.5, %v460
        %v462 = vmul.f32 %v457, %v461
        %vm463 = vweird.f32 %v426
        %vm464 = vweird.f32 %v457
        %vm465 = vmor %vm463, %vm464
        %v466 = vsel %vm465, %v457, %v462
        %v467 = vmul.f32 %v387, %v436
        %v468 = vmul.f32 %v388, %v446
        %v469 = vmul.f32 %v389, %v456
        %v470 = vmul.f32 %v390, %v466
        %v472 = vperm.slane %v373, 0
        %v474 = vmul.f32 %v467, %v472
        %v475 = vmul.f32 %v468, %v472
        %v476 = vmul.f32 %v469, %v472
        %v477 = vmul.f32 %v470, %v472
        %v479 = vperm.slane %v374, 0
        %v481 = vadd.f32 %v474, %v479
        %v482 = vadd.f32 %v475, %v479
        %v483 = vadd.f32 %v476, %v479
        %v484 = vadd.f32 %v477, %v479
        %v485 = vmax.f32 %v481, 0.0
        %v486 = vmax.f32 %v482, 0.0
        %v487 = vmax.f32 %v483, 0.0
        %v488 = vmax.f32 %v484, 0.0
        %v489 = vpack.c.bf16 %v485, %v485
        %v490 = vpack.c.bf16 %v486, %v486
        %v491 = vpack.c.bf16 %v487, %v487
        %v492 = vpack.c.bf16 %v488, %v488
        %493 = vst [vmem:[#allocation2] sm:$0xf] %v489
        %494 = vst [vmem:[#allocation2 + $0x4] sm:$0xf] %v490
        %495 = vst [vmem:[#allocation2 + $0x8] sm:$0xf] %v491
        %496 = vst [vmem:[#allocation2 + $0xc] sm:$0xf] %v492
        %v497 = vld [vmem:[#allocation2] sm:$0xf]
        %v498 = vld [vmem:[#allocation2 + $0x4] sm:$0xf]
        %v499 = vld [vmem:[#allocation2 + $0x8] sm:$0xf]
        %v500 = vld [vmem:[#allocation2 + $0xc] sm:$0xf]
        %v501 = vld [vmem:[%s4] sm:$0xf]
        %v502 = vld [vmem:[%s4 + $0x4] sm:$0xf]
        %v503 = vld [vmem:[%s4 + $0x8] sm:$0xf]
        %v504 = vld [vmem:[%s4 + $0xc] sm:$0xf]
        %v505 = vld [vmem:[%s4 + $0x10] sm:$0xf]
        %v506 = vld [vmem:[%s4 + $0x14] sm:$0xf]
        %v507 = vld [vmem:[%s4 + $0x18] sm:$0xf]
        %v508 = vld [vmem:[%s4 + $0x1c] sm:$0xf]
        %v509 = vld [vmem:[%s4 + $0x20] sm:$0xf]
        %v510 = vld [vmem:[%s4 + $0x24] sm:$0xf]
        %v511 = vld [vmem:[%s4 + $0x28] sm:$0xf]
        %v512 = vld [vmem:[%s4 + $0x2c] sm:$0xf]
        %v513 = vld [vmem:[%s4 + $0x30] sm:$0xf]
        %v514 = vld [vmem:[%s4 + $0x34] sm:$0xf]
        %v515 = vld [vmem:[%s4 + $0x38] sm:$0xf]
        %v516 = vld [vmem:[%s4 + $0x3c] sm:$0xf]
        %v521 = vunpack.c.l.b16 %v497
        %v522 = vunpack.c.l.b16 %v498
        %v523 = vunpack.c.l.b16 %v499
        %v524 = vunpack.c.l.b16 %v500
        %v525 = vpack.c.b16 %v522, %v521
        %v526 = vpack.c.b16 %v524, %v523
        %v545 = vunpack.c.l.b16 %v501
        %v546 = vunpack.c.l.b16 %v502
        %v547 = vunpack.c.l.b16 %v503
        %v548 = vunpack.c.l.b16 %v504
        %v549 = vunpack.c.l.b16 %v505
        %v550 = vunpack.c.l.b16 %v506
        %v551 = vunpack.c.l.b16 %v507
        %v552 = vunpack.c.l.b16 %v508
        %v553 = vunpack.c.l.b16 %v509
        %v554 = vunpack.c.l.b16 %v510
        %v555 = vunpack.c.l.b16 %v511
        %v556 = vunpack.c.l.b16 %v512
        %v557 = vunpack.c.l.b16 %v513
        %v558 = vunpack.c.l.b16 %v514
        %v559 = vunpack.c.l.b16 %v515
        %v560 = vunpack.c.l.b16 %v516
        %v561 = vpack.c.b16 %v546, %v545
        %v562 = vpack.c.b16 %v548, %v547
        %v563 = vpack.c.b16 %v550, %v549
        %v564 = vpack.c.b16 %v552, %v551
        %v565 = vpack.c.b16 %v554, %v553
        %v566 = vpack.c.b16 %v556, %v555
        %v567 = vpack.c.b16 %v558, %v557
        %v568 = vpack.c.b16 %v560, %v559
        %577 = vmatpush.bf16.msra.mxu0 %v568
        %578 = vmatpush.bf16.msra.mxu0 %v567
        %579 = vmatpush.bf16.msra.mxu0 %v566
        %580 = vmatpush.bf16.msra.mxu0 %v565
        %581 = vmatpush.bf16.msra.mxu0 %v564
        %582 = vmatpush.bf16.msra.mxu0 %v563
        %583 = vmatpush.bf16.msra.mxu0 %v562
        %584 = vmatpush.bf16.msra.mxu0 %v561
        %585 = vmatmul.bf16.gmra.mxu0 %v525
        %v586 = vpop.f32.mrf.mxu0
        %v587 = vadd.f32 0.0, %v586
        %v588 = vpop.f32.mrf.mxu0
        %v589 = vadd.f32 0.0, %v588
        %590 = vmatmul.bf16.gmra.mxu0 %v526
        %v591 = vpop.f32.mrf.mxu0
        %v592 = vadd.f32 0.0, %v591
        %v593 = vpop.f32.mrf.mxu0
        %v594 = vadd.f32 0.0, %v593
        %595 = vdwg.mxu0
        %v596 = vld [vmem:[%s5] sm:$0x1]
        %v597 = vld [vmem:[%s6] sm:$0x1]
        %598 = vadd.xlane.f32.xlu0 %v587
        %v599 = vpop.xlane.xlu0 %598
        %600 = vadd.xlane.f32.xlu0 %v589
        %v601 = vpop.xlane.xlu0 %600
        %602 = vadd.xlane.f32.xlu0 %v592
        %v603 = vpop.xlane.xlu0 %602
        %604 = vadd.xlane.f32.xlu0 %v594
        %v605 = vpop.xlane.xlu0 %604
        %v606 = vmul.f32 %v599, 0.03125
        %v607 = vmul.f32 %v601, 0.03125
        %v608 = vmul.f32 %v603, 0.03125
        %v609 = vmul.f32 %v605, 0.03125
        %v610 = vsub.f32 %v587, %v606
        %v611 = vsub.f32 %v589, %v607
        %v612 = vsub.f32 %v592, %v608
        %v613 = vsub.f32 %v594, %v609
        %v614 = vmul.f32 %v610, %v610
        %v615 = vmul.f32 %v611, %v611
        %v616 = vmul.f32 %v612, %v612
        %v617 = vmul.f32 %v613, %v613
        %618 = vadd.xlane.f32.xlu0 %v614
        %v619 = vpop.xlane.xlu0 %618
        %620 = vadd.xlane.f32.xlu0 %v615
        %v621 = vpop.xlane.xlu0 %620
        %622 = vadd.xlane.f32.xlu0 %v616
        %v623 = vpop.xlane.xlu0 %622
        %624 = vadd.xlane.f32.xlu0 %v617
        %v625 = vpop.xlane.xlu0 %624
        %v626 = vmul.f32 %v606, %v606
        %v627 = vmul.f32 %v607, %v607
        %v628 = vmul.f32 %v608, %v608
        %v629 = vmul.f32 %v609, %v609
        %v630 = vmul.f32 %v626, 96.0
        %v631 = vmul.f32 %v627, 96.0
        %v632 = vmul.f32 %v628, 96.0
        %v633 = vmul.f32 %v629, 96.0
        %v634 = vsub.f32 %v619, %v630
        %v635 = vsub.f32 %v621, %v631
        %v636 = vsub.f32 %v623, %v632
        %v637 = vsub.f32 %v625, %v633
        %v638 = vmul.f32 %v634, 0.03125
        %v639 = vmul.f32 %v635, 0.03125
        %v640 = vmul.f32 %v636, 0.03125
        %v641 = vmul.f32 %v637, 0.03125
        %v642 = vmax.f32 %v638, 0.0
        %v643 = vmax.f32 %v639, 0.0
        %v644 = vmax.f32 %v640, 0.0
        %v645 = vmax.f32 %v641, 0.0
        %v646 = vadd.f32 %v642, 1e-05
        %v647 = vadd.f32 %v643, 1e-05
        %v648 = vadd.f32 %v644, 1e-05
        %v649 = vadd.f32 %v645, 1e-05
        %v650 = vrsqrt.pop %v646
        %v651 = vmul.f32 %v650, %v646
        %v652 = vmul.f32 %v651, %v650
        %v653 = vmul.f32 0.5, %v652
        %v654 = vsub.f32 1.5, %v653
        %v655 = vmul.f32 %v650, %v654
        %vm656 = vweird.f32 %v646
        %vm657 = vweird.f32 %v650
        %vm658 = vmor %vm656, %vm657
        %v659 = vsel %vm658, %v650, %v655
        %v660 = vrsqrt.pop %v647
        %v661 = vmul.f32 %v660, %v647
        %v662 = vmul.f32 %v661, %v660
        %v663 = vmul.f32 0.5, %v662
        %v664 = vsub.f32 1.5, %v663
        %v665 = vmul.f32 %v660, %v664
        %vm666 = vweird.f32 %v647
        %vm667 = vweird.f32 %v660
        %vm668 = vmor %vm666, %vm667
        %v669 = vsel %vm668, %v660, %v665
        %v670 = vrsqrt.pop %v648
        %v671 = vmul.f32 %v670, %v648
        %v672 = vmul.f32 %v671, %v670
        %v673 = vmul.f32 0.5, %v672
        %v674 = vsub.f32 1.5, %v673
        %v675 = vmul.f32 %v670, %v674
        %vm676 = vweird.f32 %v648
        %vm677 = vweird.f32 %v670
        %vm678 = vmor %vm676, %vm677
        %v679 = vsel %vm678, %v670, %v675
        %v680 = vrsqrt.pop %v649
        %v681 = vmul.f32 %v680, %v649
        %v682 = vmul.f32 %v681, %v680
        %v683 = vmul.f32 0.5, %v682
        %v684 = vsub.f32 1.5, %v683
        %v685 = vmul.f32 %v680, %v684
        %vm686 = vweird.f32 %v649
        %vm687 = vweird.f32 %v680
        %vm688 = vmor %vm686, %vm687
        %v689 = vsel %vm688, %v680, %v685
        %v690 = vmul.f32 %v610, %v659
        %v691 = vmul.f32 %v611, %v669
        %v692 = vmul.f32 %v612, %v679
        %v693 = vmul.f32 %v613, %v689
        %v695 = vperm.slane %v596, 0
        %v697 = vmul.f32 %v690, %v695
        %v698 = vmul.f32 %v691, %v695
        %v699 = vmul.f32 %v692, %v695
        %v700 = vmul.f32 %v693, %v695
        %v702 = vperm.slane %v597, 0
        %v704 = vadd.f32 %v697, %v702
        %v705 = vadd.f32 %v698, %v702
        %v706 = vadd.f32 %v699, %v702
        %v707 = vadd.f32 %v700, %v702
        %v708 = vmax.f32 %v704, 0.0
        %v709 = vmax.f32 %v705, 0.0
        %v710 = vmax.f32 %v706, 0.0
        %v711 = vmax.f32 %v707, 0.0
        %v712 = vpack.c.bf16 %v708, %v708
        %v713 = vpack.c.bf16 %v709, %v709
        %v714 = vpack.c.bf16 %v710, %v710
        %v715 = vpack.c.bf16 %v711, %v711
        %716 = vst [vmem:[#allocation3] sm:$0xf] %v712
        %717 = vst [vmem:[#allocation3 + $0x4] sm:$0xf] %v713
        %718 = vst [vmem:[#allocation3 + $0x8] sm:$0xf] %v714
        %719 = vst [vmem:[#allocation3 + $0xc] sm:$0xf] %v715
        %v720 = vld [vmem:[#allocation3] sm:$0xf]
        %v721 = vld [vmem:[#allocation3 + $0x4] sm:$0xf]
        %v722 = vld [vmem:[#allocation3 + $0x8] sm:$0xf]
        %v723 = vld [vmem:[#allocation3 + $0xc] sm:$0xf]
        %v724 = vld [vmem:[#allocation4] sm:$0xf]
        %v725 = vld [vmem:[#allocation4 + $0x4] sm:$0xf]
        %v726 = vld [vmem:[#allocation4 + $0x8] sm:$0xf]
        %v727 = vld [vmem:[#allocation4 + $0xc] sm:$0xf]
        %v728 = vld [vmem:[#allocation4 + $0x10] sm:$0xf]
        %v729 = vld [vmem:[#allocation4 + $0x14] sm:$0xf]
        %v730 = vld [vmem:[#allocation4 + $0x18] sm:$0xf]
        %v731 = vld [vmem:[#allocation4 + $0x1c] sm:$0xf]
        %v732 = vld [vmem:[#allocation4 + $0x20] sm:$0xf]
        %v733 = vld [vmem:[#allocation4 + $0x24] sm:$0xf]
        %v734 = vld [vmem:[#allocation4 + $0x28] sm:$0xf]
        %v735 = vld [vmem:[#allocation4 + $0x2c] sm:$0xf]
        %v736 = vld [vmem:[#allocation4 + $0x30] sm:$0xf]
        %v737 = vld [vmem:[#allocation4 + $0x34] sm:$0xf]
        %v738 = vld [vmem:[#allocation4 + $0x38] sm:$0xf]
        %v739 = vld [vmem:[#allocation4 + $0x3c] sm:$0xf]
        %v744 = vunpack.c.l.b16 %v720
        %v745 = vunpack.c.l.b16 %v721
        %v746 = vunpack.c.l.b16 %v722
        %v747 = vunpack.c.l.b16 %v723
        %v748 = vpack.c.b16 %v745, %v744
        %v749 = vpack.c.b16 %v747, %v746
        %v768 = vunpack.c.l.b16 %v724
        %v769 = vunpack.c.l.b16 %v725
        %v770 = vunpack.c.l.b16 %v726
        %v771 = vunpack.c.l.b16 %v727
        %v772 = vunpack.c.l.b16 %v728
        %v773 = vunpack.c.l.b16 %v729
        %v774 = vunpack.c.l.b16 %v730
        %v775 = vunpack.c.l.b16 %v731
        %v776 = vunpack.c.l.b16 %v732
        %v777 = vunpack.c.l.b16 %v733
        %v778 = vunpack.c.l.b16 %v734
        %v779 = vunpack.c.l.b16 %v735
        %v780 = vunpack.c.l.b16 %v736
        %v781 = vunpack.c.l.b16 %v737
        %v782 = vunpack.c.l.b16 %v738
        %v783 = vunpack.c.l.b16 %v739
        %v784 = vpack.c.b16 %v769, %v768
        %v785 = vpack.c.b16 %v771, %v770
        %v786 = vpack.c.b16 %v773, %v772
        %v787 = vpack.c.b16 %v775, %v774
        %v788 = vpack.c.b16 %v777, %v776
        %v789 = vpack.c.b16 %v779, %v778
        %v790 = vpack.c.b16 %v781, %v780
        %v791 = vpack.c.b16 %v783, %v782
        %800 = vmatpush.bf16.msra.mxu0 %v791
        %801 = vmatpush.bf16.msra.mxu0 %v790
        %802 = vmatpush.bf16.msra.mxu0 %v789
        %803 = vmatpush.bf16.msra.mxu0 %v788
        %804 = vmatpush.bf16.msra.mxu0 %v787
        %805 = vmatpush.bf16.msra.mxu0 %v786
        %806 = vmatpush.bf16.msra.mxu0 %v785
        %807 = vmatpush.bf16.msra.mxu0 %v784
        %808 = vmatmul.bf16.gmra.mxu0 %v748
        %v809 = vpop.f32.mrf.mxu0
        %v810 = vadd.f32 0.0, %v809
        %v811 = vpop.f32.mrf.mxu0
        %v812 = vadd.f32 0.0, %v811
        %813 = vmatmul.bf16.gmra.mxu0 %v749
        %v814 = vpop.f32.mrf.mxu0
        %v815 = vadd.f32 0.0, %v814
        %v816 = vpop.f32.mrf.mxu0
        %v817 = vadd.f32 0.0, %v816
        %818 = vdwg.mxu0
        %v819 = vmax.f32 %v810, 0.0
        %v820 = vmax.f32 %v812, 0.0
        %v821 = vmax.f32 %v815, 0.0
        %v822 = vmax.f32 %v817, 0.0
        %823 = vst [vmem:[%s316] sm:$0xff] %v819
        %824 = vst [vmem:[%s316 + $0x8] sm:$0xff] %v820
        %825 = vst [vmem:[%s316 + $0x10] sm:$0xff] %v821
        %826 = vst [vmem:[%s316 + $0x18] sm:$0xff] %v822
        %s827 = sand.u32 %s204, 1
        %s828 = scalar_lea.sflag [#allocation6], %s827
        %s829 = sand.u32 %s204, 1
        %s830 = smul.addr %s829, 32
        %s831 = scalar_lea.vmem [#allocation7], %s830
        // Predicated region
        $region57: #{tpu_custom_call.1} parent=51 // pred_check
          %p832 = pneg %p214
        $region58: #{tpu_custom_call.1} parent=51 // pred_check_branch
          %834 = sbr.rel (%p832) target = $region60
        $region59: #{tpu_custom_call.1} parent=51 // pred_region
          %s835 = smul.u32 4, %s23
          %837 = vsyncadd %s828, 0
          %s838 = smul.addr %s835, 8
          %s839 = scalar_lea.hbm %s8, %s838
          %s840 = sshll.u32 %s831, 4
          %s841 = int_to_ptr.vmem [resolvable:$true] %s840
          %s842 = sshll.u32 %s839, 4
          %s843 = int_to_ptr.hbm [resolvable:$true] %s842
          %848 = dma.vmem_to_hbm [thread:$0]  %s841, 512, %s843, %s828, 128, 128, 8
        $region60: #{tpu_custom_call.1} parent=51 // pred_fallthru
          _
      $region52: #{tpu_custom_call.1} parent=5 // pred_fallthru
        _
      %p849 = scmp.le.s32.totalorder 2, %s18
      // Predicated region
      $region61: #{tpu_custom_call.1} parent=5 // pred_check
        %p850 = pneg %p849
      $region62: #{tpu_custom_call.1} parent=5 // pred_check_branch
        %852 = sbr.rel (%p850) target = $region64
      $region63: #{tpu_custom_call.1} parent=5 // pred_region
        %s853 = ssub.s32 %s18, 2
        // Predicated region
        $region65: #{tpu_custom_call.1} parent=63 // pred_check
          %p854 = pneg %p220
        $region66: #{tpu_custom_call.1} parent=63 // pred_check_branch
          %856 = sbr.rel (%p854) target = $region68
        $region67: #{tpu_custom_call.1} parent=63 // pred_region
          %s857 = sand.u32 %s205, 1
          %s858 = scalar_lea.sflag [#allocation6], %s857
          %s859 = sand.u32 %s205, 1
          %s860 = smul.addr %s859, 32
          %s861 = scalar_lea.vmem [#allocation7], %s860
          %863 = dma.done %s858, 512
        $region68: #{tpu_custom_call.1} parent=63 // pred_fallthru
          _
      $region64: #{tpu_custom_call.1} parent=5 // pred_fallthru
        _
    $region6: #{tpu_custom_call.1} parent=1 // loop_footer
      %s22 = sadd.s32 1, %s18
    $region7: #{tpu_custom_call.1} parent=1 // loop_footer_branch
      %17 = sbr.rel target = $region3
    $region8: #{tpu_custom_call.1} parent=1 // loop_exit
      _
    %864 = vsyncpa [#allocation5], 1
    %s865 = scalar_lea.sflag [#allocation5], 1
    %866 = vsyncpa %s865, 1
    %867 = vsyncpa [#allocation6], 1
    %s868 = scalar_lea.sflag [#allocation6], 1
    %869 = vsyncpa %s868, 1

// kernel: tpu_custom_call.1
$region0: #{tpu_custom_call.1}
  #allocation0 [shape = 'u32[]', space=smem, size = 0x4, offset = 0x4, fixed_abs, tag = 'smem constant byte address 0x4 - core index']
  #allocation1 [shape = 'u32[72,128]{1,0:T(1,128)}', space=vmem, size = 0x9000, scoped, tag = 'internal scratch']
  #allocation2 [shape = 'bf16[32,128]{1,0:T(8,128)(2,1)}', space=vmem, size = 0x2000, scoped, tag = 'scratch operand']
  #allocation3 [shape = 'bf16[32,128]{1,0:T(8,128)(2,1)}', space=vmem, size = 0x2000, scoped, tag = 'scratch operand']
  %s0 = inlined_call_operand.vmem [shape: f32[64,32], index: 0, kind: input, shape index: {}]
  %s1 = inlined_call_operand.vmem [shape: bf16[32,128], index: 1, kind: input, shape index: {}]
  %s2 = inlined_call_operand.vmem [shape: f32[1,128], index: 2, kind: input, shape index: {}]
  %s3 = inlined_call_operand.vmem [shape: f32[1,128], index: 3, kind: input, shape index: {}]
  %s4 = inlined_call_operand.vmem [shape: bf16[128,128], index: 4, kind: input, shape index: {}]
  %s5 = inlined_call_operand.vmem [shape: f32[1,128], index: 5, kind: input, shape index: {}]
  %s6 = inlined_call_operand.vmem [shape: f32[1,128], index: 6, kind: input, shape index: {}]
  %s7 = inlined_call_operand.hbm [shape: bf16[128,128], index: 7, kind: input, shape index: {}]
  %s8 = inlined_call_operand.hbm [shape: f32[64,128], index: 8, kind: output, shape index: {}]
  %s9 = sld [smem:[#allocation0]]
  $region69: #{tpu_custom_call.1} parent=0
    _
  %s11 = ssub.s32 1, %s9
  %s12 = scalar_select 0, %s11, %s9
  $region1: #{tpu_custom_call.1} parent=0
    #allocation4 [shape = 'u8[32768]{0}', space=vmem, size = 0x8000, scoped, tag = 'input window, operand 7, single buffered']
    #allocation5 [shape = 's32[2]{0}', space=sflag, size = 0x8, scoped, tag = 'scoped memory for tpu_custom_call.1']
    #allocation6 [shape = 's32[2]{0}', space=sflag, size = 0x8, scoped, tag = 'scoped memory for tpu_custom_call.1']
    #allocation7 [shape = 'u8[32768]{0}', space=vmem, size = 0x8000, scoped, tag = 'output window, operand 0']
    %13 = vsyncpa [#allocation5], 0
    %14 = vsyncpa [#allocation6], 0
    %s15 = scalar_lea.sflag [#allocation6], 1
    %16 = vsyncpa %s15, 0
    loop: start=0, step=1, limit=4
    $region2: #{tpu_custom_call.1} parent=1 // loop_pre_header
      _
    $region3: #{tpu_custom_call.1} parent=1 // loop_header
      %s18 = sphi 0, %s22
      %p19 = scmp.ge.s32.totalorder %s18, 4
      %s28 = sphi 0, %s30
      %s31 = sphi 0, %s28
      %s32 = sphi 0, %s31
      %s48 = sphi 0, %s32
      %s52 = sphi 0, %s52
      %s54 = sphi 0, %s52
      %s55 = sphi 0, %s54
      %s69 = sphi 0, %s55
      %s73 = sphi 0, %s73
      %s75 = sphi 0, %s73
      %s76 = sphi 0, %s75
      %s90 = sphi 0, %s76
      %s94 = sphi 0, %s94
      %s96 = sphi 0, %s94
      %s97 = sphi 0, %s96
      %s111 = sphi 0, %s97
      %s115 = sphi 0, %s115
      %s117 = sphi 0, %s115
      %s118 = sphi 0, %s117
      %s132 = sphi 0, %s118
      %s136 = sphi 0, %s136
      %s138 = sphi 0, %s136
      %s139 = sphi 0, %s138
      %s153 = sphi 0, %s139
      %s157 = sphi 0, %s157
      %s159 = sphi 0, %s157
      %s160 = sphi 0, %s159
      %s174 = sphi 0, %s160
      %s178 = sphi 0, %s178
      %s180 = sphi 0, %s178
      %s181 = sphi 0, %s180
      %s195 = sphi 0, %s181
      %s201 = sphi 0, %s203
      %s204 = sphi 0, %s201
      %s205 = sphi 0, %s204
      %s221 = sphi 0, %s205
    $region4: #{tpu_custom_call.1} parent=1 // loop_header_branch
      %21 = sbr.rel (%p19) target = $region8
    $region5: #{tpu_custom_call.1} parent=1 // loop_body
      %s23 = ssub.s32 %s18, 1
      %s24 = ssub.s32 %s18, 2
      %s25 = sadd.s32 %s18, 1
      %s26 = ssub.s32 %s18, %s25
      %p27 = scmp.eq.s32.totalorder %s26, 0
      %s29 = sadd.s32 %s28, 1
      %s30 = scalar_select %p27, %s28, %s29
      %p33 = pneg %p27
      %p34 = scmp.eq.s32.totalorder %s18, 1
      %p35 = por %p33, %p34
      %p36 = scmp.ne.s32.totalorder %s28, %s31
      %p37 = scmp.eq.s32.totalorder %s18, 0
      %p38 = por %p36, %p37
      %p39 = scmp.ne.s32.totalorder %s28, %s31
      %p40 = scmp.eq.s32.totalorder %s23, 1
      %p41 = por %p39, %p40
      %p42 = scmp.ne.s32.totalorder %s31, %s32
      %p43 = scmp.eq.s32.totalorder %s23, 0
      %p44 = por %p42, %p43
      %p45 = scmp.ne.s32.totalorder %s31, %s32
      %p46 = scmp.eq.s32.totalorder %s24, 1
      %p47 = por %p45, %p46
      %p49 = scmp.ne.s32.totalorder %s32, %s48
      %p50 = scmp.eq.s32.totalorder %s24, 0
      %p51 = por %p49, %p50
      %s53 = sadd.s32 %s52, 1
      %p56 = scmp.eq.s32.totalorder %s18, 1
      %p57 = scmp.ne.s32.totalorder %s52, %s54
      %p58 = scmp.eq.s32.totalorder %s18, 0
      %p59 = por %p57, %p58
      %p60 = scmp.ne.s32.totalorder %s52, %s54
      %p61 = scmp.eq.s32.totalorder %s23, 1
      %p62 = por %p60, %p61
      %p63 = scmp.ne.s32.totalorder %s54, %s55
      %p64 = scmp.eq.s32.totalorder %s23, 0
      %p65 = por %p63, %p64
      %p66 = scmp.ne.s32.totalorder %s54, %s55
      %p67 = scmp.eq.s32.totalorder %s24, 1
      %p68 = por %p66, %p67
      %p70 = scmp.ne.s32.totalorder %s55, %s69
      %p71 = scmp.eq.s32.totalorder %s24, 0
      %p72 = por %p70, %p71
      %s74 = sadd.s32 %s73, 1
      %p77 = scmp.eq.s32.totalorder %s18, 1
      %p78 = scmp.ne.s32.totalorder %s73, %s75
      %p79 = scmp.eq.s32.totalorder %s18, 0
      %p80 = por %p78, %p79
      %p81 = scmp.ne.s32.totalorder %s73, %s75
      %p82 = scmp.eq.s32.totalorder %s23, 1
      %p83 = por %p81, %p82
      %p84 = scmp.ne.s32.totalorder %s75, %s76
      %p85 = scmp.eq.s32.totalorder %s23, 0
      %p86 = por %p84, %p85
      %p87 = scmp.ne.s32.totalorder %s75, %s76
      %p88 = scmp.eq.s32.totalorder %s24, 1
      %p89 = por %p87, %p88
      %p91 = scmp.ne.s32.totalorder %s76, %s90
      %p92 = scmp.eq.s32.totalorder %s24, 0
      %p93 = por %p91, %p92
      %s95 = sadd.s32 %s94, 1
      %p98 = scmp.eq.s32.totalorder %s18, 1
      %p99 = scmp.ne.s32.totalorder %s94, %s96
      %p100 = scmp.eq.s32.totalorder %s18, 0
      %p101 = por %p99, %p100
      %p102 = scmp.ne.s32.totalorder %s94, %s96
      %p103 = scmp.eq.s32.totalorder %s23, 1
      %p104 = por %p102, %p103
      %p105 = scmp.ne.s32.totalorder %s96, %s97
      %p106 = scmp.eq.s32.totalorder %s23, 0
      %p107 = por %p105, %p106
      %p108 = scmp.ne.s32.totalorder %s96, %s97
      %p109 = scmp.eq.s32.totalorder %s24, 1
      %p110 = por %p108, %p109
      %p112 = scmp.ne.s32.totalorder %s97, %s111
      %p113 = scmp.eq.s32.totalorder %s24, 0
      %p114 = por %p112, %p113
      %s116 = sadd.s32 %s115, 1
      %p119 = scmp.eq.s32.totalorder %s18, 1
      %p120 = scmp.ne.s32.totalorder %s115, %s117
      %p121 = scmp.eq.s32.totalorder %s18, 0
      %p122 = por %p120, %p121
      %p123 = scmp.ne.s32.totalorder %s115, %s117
      %p124 = scmp.eq.s32.totalorder %s23, 1
      %p125 = por %p123, %p124
      %p126 = scmp.ne.s32.totalorder %s117, %s118
      %p127 = scmp.eq.s32.totalorder %s23, 0
      %p128 = por %p126, %p127
      %p129 = scmp.ne.s32.totalorder %s117, %s118
      %p130 = scmp.eq.s32.totalorder %s24, 1
      %p131 = por %p129, %p130
      %p133 = scmp.ne.s32.totalorder %s118, %s132
      %p134 = scmp.eq.s32.totalorder %s24, 0
      %p135 = por %p133, %p134
      %s137 = sadd.s32 %s136, 1
      %p140 = scmp.eq.s32.totalorder %s18, 1
      %p141 = scmp.ne.s32.totalorder %s136, %s138
      %p142 = scmp.eq.s32.totalorder %s18, 0
      %p143 = por %p141, %p142
      %p144 = scmp.ne.s32.totalorder %s136, %s138
      %p145 = scmp.eq.s32.totalorder %s23, 1
      %p146 = por %p144, %p145
      %p147 = scmp.ne.s32.totalorder %s138, %s139
      %p148 = scmp.eq.s32.totalorder %s23, 0
      %p149 = por %p147, %p148
      %p150 = scmp.ne.s32.totalorder %s138, %s139
      %p151 = scmp.eq.s32.totalorder %s24, 1
      %p152 = por %p150, %p151
      %p154 = scmp.ne.s32.totalorder %s139, %s153
      %p155 = scmp.eq.s32.totalorder %s24, 0
      %p156 = por %p154, %p155
      %s158 = sadd.s32 %s157, 1
      %p161 = scmp.eq.s32.totalorder %s18, 1
      %p162 = scmp.ne.s32.totalorder %s157, %s159
      %p163 = scmp.eq.s32.totalorder %s18, 0
      %p164 = por %p162, %p163
      %p165 = scmp.ne.s32.totalorder %s157, %s159
      %p166 = scmp.eq.s32.totalorder %s23, 1
      %p167 = por %p165, %p166
      %p168 = scmp.ne.s32.totalorder %s159, %s160
      %p169 = scmp.eq.s32.totalorder %s23, 0
      %p170 = por %p168, %p169
      %p171 = scmp.ne.s32.totalorder %s159, %s160
      %p172 = scmp.eq.s32.totalorder %s24, 1
      %p173 = por %p171, %p172
      %p175 = scmp.ne.s32.totalorder %s160, %s174
      %p176 = scmp.eq.s32.totalorder %s24, 0
      %p177 = por %p175, %p176
      %s179 = sadd.s32 %s178, 1
      %p182 = scmp.eq.s32.totalorder %s18, 1
      %p183 = scmp.ne.s32.totalorder %s178, %s180
      %p184 = scmp.eq.s32.totalorder %s18, 0
      %p185 = por %p183, %p184
      %p186 = scmp.ne.s32.totalorder %s178, %s180
      %p187 = scmp.eq.s32.totalorder %s23, 1
      %p188 = por %p186, %p187
      %p189 = scmp.ne.s32.totalorder %s180, %s181
      %p190 = scmp.eq.s32.totalorder %s23, 0
      %p191 = por %p189, %p190
      %p192 = scmp.ne.s32.totalorder %s180, %s181
      %p193 = scmp.eq.s32.totalorder %s24, 1
      %p194 = por %p192, %p193
      %p196 = scmp.ne.s32.totalorder %s181, %s195
      %p197 = scmp.eq.s32.totalorder %s24, 0
      %p198 = por %p196, %p197
      %s199 = ssub.s32 %s18, %s25
      %p200 = scmp.eq.s32.totalorder %s199, 0
      %s202 = sadd.s32 %s201, 1
      %s203 = scalar_select %p200, %s201, %s202
      %p206 = pneg %p200
      %p207 = scmp.eq.s32.totalorder %s18, 1
      %p208 = por %p206, %p207
      %p209 = scmp.ne.s32.totalorder %s201, %s204
      %p210 = scmp.eq.s32.totalorder %s18, 0
      %p211 = por %p209, %p210
      %p212 = scmp.ne.s32.totalorder %s201, %s204
      %p213 = scmp.eq.s32.totalorder %s23, 1
      %p214 = por %p212, %p213
      %p215 = scmp.ne.s32.totalorder %s204, %s205
      %p216 = scmp.eq.s32.totalorder %s23, 0
      %p217 = por %p215, %p216
      %p218 = scmp.ne.s32.totalorder %s204, %s205
      %p219 = scmp.eq.s32.totalorder %s24, 1
      %p220 = por %p218, %p219
      %p222 = scmp.ne.s32.totalorder %s205, %s221
      %p223 = scmp.eq.s32.totalorder %s24, 0
      %p224 = por %p222, %p223
      %p225 = scmp.le.s32.totalorder 1, %s18
      %p226 = scmp.lt.s32.totalorder %s18, 3
      %p227 = pnand %p225, %p226
      %p228 = pneg %p227
      // Predicated region
      $region9: #{tpu_custom_call.1} parent=5 // pred_check
        _
      $region10: #{tpu_custom_call.1} parent=5 // pred_check_branch
        %230 = sbr.rel (%p227) target = $region12
      $region11: #{tpu_custom_call.1} parent=5 // pred_region
        %s231 = ssub.s32 %s18, 1
        // Predicated region
        $region13: #{tpu_custom_call.1} parent=11 // pred_check
          %p232 = pneg %p65
        $region14: #{tpu_custom_call.1} parent=11 // pred_check_branch
          %234 = sbr.rel (%p232) target = $region16
        $region15: #{tpu_custom_call.1} parent=11 // pred_region
          _
        $region16: #{tpu_custom_call.1} parent=11 // pred_fallthru
          _
        // Predicated region
        $region17: #{tpu_custom_call.1} parent=11 // pred_check
          %p235 = pneg %p86
        $region18: #{tpu_custom_call.1} parent=11 // pred_check_branch
          %237 = sbr.rel (%p235) target = $region20
        $region19: #{tpu_custom_call.1} parent=11 // pred_region
          _
        $region20: #{tpu_custom_call.1} parent=11 // pred_fallthru
          _
        // Predicated region
        $region21: #{tpu_custom_call.1} parent=11 // pred_check
          %p238 = pneg %p107
        $region22: #{tpu_custom_call.1} parent=11 // pred_check_branch
          %240 = sbr.rel (%p238) target = $region24
        $region23: #{tpu_custom_call.1} parent=11 // pred_region
          _
        $region24: #{tpu_custom_call.1} parent=11 // pred_fallthru
          _
        // Predicated region
        $region25: #{tpu_custom_call.1} parent=11 // pred_check
          %p241 = pneg %p128
        $region26: #{tpu_custom_call.1} parent=11 // pred_check_branch
          %243 = sbr.rel (%p241) target = $region28
        $region27: #{tpu_custom_call.1} parent=11 // pred_region
          _
        $region28: #{tpu_custom_call.1} parent=11 // pred_fallthru
          _
        // Predicated region
        $region29: #{tpu_custom_call.1} parent=11 // pred_check
          %p244 = pneg %p149
        $region30: #{tpu_custom_call.1} parent=11 // pred_check_branch
          %246 = sbr.rel (%p244) target = $region32
        $region31: #{tpu_custom_call.1} parent=11 // pred_region
          _
        $region32: #{tpu_custom_call.1} parent=11 // pred_fallthru
          _
        // Predicated region
        $region33: #{tpu_custom_call.1} parent=11 // pred_check
          %p247 = pneg %p170
        $region34: #{tpu_custom_call.1} parent=11 // pred_check_branch
          %249 = sbr.rel (%p247) target = $region36
        $region35: #{tpu_custom_call.1} parent=11 // pred_region
          _
        $region36: #{tpu_custom_call.1} parent=11 // pred_fallthru
          _
        // Predicated region
        $region37: #{tpu_custom_call.1} parent=11 // pred_check
          %p250 = pneg %p191
        $region38: #{tpu_custom_call.1} parent=11 // pred_check_branch
          %252 = sbr.rel (%p250) target = $region40
        $region39: #{tpu_custom_call.1} parent=11 // pred_region
          %254 = vsyncadd [#allocation5], 0
          %s255 = sshll.u32 %s7, 4
          %s256 = int_to_ptr.hbm [resolvable:$true] %s255
          %s257 = sshll.u32 [#allocation4], 4
          %s258 = int_to_ptr.vmem [resolvable:$true] %s257
          %263 = dma.hbm_to_vmem [thread:$0]  %s256, 1024, %s258, [#allocation5], 64, 64, 4
        $region40: #{tpu_custom_call.1} parent=11 // pred_fallthru
          _
      $region12: #{tpu_custom_call.1} parent=5 // pred_fallthru
        _
      %p264 = scmp.lt.s32.totalorder %s18, 2
      // Predicated region
      $region41: #{tpu_custom_call.1} parent=5 // pred_check
        %p265 = pneg %p264
      $region42: #{tpu_custom_call.1} parent=5 // pred_check_branch
        %267 = sbr.rel (%p265) target = $region44
      $region43: #{tpu_custom_call.1} parent=5 // pred_region
        // Predicated region
        $region45: #{tpu_custom_call.1} parent=43 // pred_check
          %p268 = pneg %p38
        $region46: #{tpu_custom_call.1} parent=43 // pred_check_branch
          %270 = sbr.rel (%p268) target = $region48
        $region47: #{tpu_custom_call.1} parent=43 // pred_region
          %s271 = smul.u32 4, %s18
          %p272 = scmp.lt.s32.totalorder %s271, 7
          %s273 = scalar_select %p272, %s271, 7
          %s274 = smul.addr %s273, 8
          %s275 = scalar_lea.vmem %s0, %s274
          %s276 = smul.u32 4, %s18
        $region48: #{tpu_custom_call.1} parent=43 // pred_fallthru
          _
      $region44: #{tpu_custom_call.1} parent=5 // pred_fallthru
        _
      %p277 = scmp.le.s32.totalorder 1, %s18
      %p278 = scmp.lt.s32.totalorder %s18, 3
      %p279 = pnand %p277, %p278
      %p280 = pneg %p279
      // Predicated region
      $region49: #{tpu_custom_call.1} parent=5 // pred_check
        _
      $region50: #{tpu_custom_call.1} parent=5 // pred_check_branch
        %282 = sbr.rel (%p279) target = $region52
      $region51: #{tpu_custom_call.1} parent=5 // pred_region
        %s283 = ssub.s32 %s18, 1
        // Predicated region
        $region53: #{tpu_custom_call.1} parent=51 // pred_check
          %p284 = pneg %p191
        $region54: #{tpu_custom_call.1} parent=51 // pred_check_branch
          %286 = sbr.rel (%p284) target = $region56
        $region55: #{tpu_custom_call.1} parent=51 // pred_region
          %288 = dma.done [#allocation5], 1024
        $region56: #{tpu_custom_call.1} parent=51 // pred_fallthru
          _
        %s289 = smul.u32 4, %s23
        %p290 = scmp.lt.s32.totalorder %s289, 7
        %s291 = scalar_select %p290, %s289, 7
        %s292 = smul.addr %s291, 8
        %s293 = scalar_lea.vmem %s0, %s292
        %p294 = pneg %p44
        %p295 = pneg %p41
        %p296 = pneg %p65
        %p297 = pneg %p62
        %p298 = pneg %p86
        %p299 = pneg %p83
        %p300 = pneg %p107
        %p301 = pneg %p104
        %p302 = pneg %p128
        %p303 = pneg %p125
        %p304 = pneg %p149
        %p305 = pneg %p146
        %p306 = pneg %p170
        %p307 = pneg %p167
        %p308 = pneg %p191
        %p309 = pneg %p188
        %p310 = pneg %p217
        %p311 = pneg %p214
        %s312 = sand.u32 %s204, 1
        %s313 = scalar_lea.sflag [#allocation6], %s312
        %s314 = sand.u32 %s204, 1
        %s315 = smul.addr %s314, 32
        %s316 = scalar_lea.vmem [#allocation7], %s315
        %s317 = smul.u32 4, %s23
        %p318 = scmp.lt.s32.totalorder %s317, 7
        %s319 = scalar_select %p318, %s317, 7
        %s320 = smul.addr %s319, 8
        %s321 = scalar_lea.vmem %s0, %s320
        %s322 = smul.u32 4, %s23
        %s323 = smul.u32 4, %s23
        %v325 = vld [vmem:[%s321] sm:$0xff]
        %v326 = vld [vmem:[%s321 + $0x8] sm:$0xff]
        %v327 = vld [vmem:[%s321 + $0x10] sm:$0xff]
        %v328 = vld [vmem:[%s321 + $0x18] sm:$0xff]
        %v329 = vpack.c.bf16 %v326, %v325
        %v330 = vpack.c.bf16 %v328, %v327
        %v331 = vld [vmem:[%s1] sm:$0xf]
        %v332 = vld [vmem:[%s1 + $0x4] sm:$0xf]
        %v333 = vld [vmem:[%s1 + $0x8] sm:$0xf]
        %v334 = vld [vmem:[%s1 + $0xc] sm:$0xf]
        %v339 = vunpack.c.l.b16 %v331
        %v340 = vunpack.c.l.b16 %v332
        %v341 = vunpack.c.l.b16 %v333
        %v342 = vunpack.c.l.b16 %v334
        %v343 = vpack.c.b16 %v340, %v339
        %v344 = vpack.c.b16 %v342, %v341
        %vm347 = vcmask 261120
        %v349 = vsel %vm347, %v329, 0
        %v352 = vsel %vm347, %v330, 0
        %354 = vmatpush.bf16.msra.mxu0 0
        %355 = vmatpush.bf16.msra.mxu0 0
        %356 = vmatpush.bf16.msra.mxu0 0
        %357 = vmatpush.bf16.msra.mxu0 0
        %358 = vmatpush.bf16.msra.mxu0 0
        %359 = vmatpush.bf16.msra.mxu0 0
        %360 = vmatpush.bf16.msra.mxu0 %v344
        %361 = vmatpush.bf16.msra.mxu0 %v343
        %362 = vmatmul.bf16.gmra.mxu0 %v349
        %v363 = vpop.f32.mrf.mxu0
        %v364 = vadd.f32 0.0, %v363
        %v365 = vpop.f32.mrf.mxu0
        %v366 = vadd.f32 0.0, %v365
        %367 = vmatmul.bf16.gmra.mxu0 %v352
        %v368 = vpop.f32.mrf.mxu0
        %v369 = vadd.f32 0.0, %v368
        %v370 = vpop.f32.mrf.mxu0
        %v371 = vadd.f32 0.0, %v370
        %372 = vdwg.mxu0
        %v373 = vld [vmem:[%s2] sm:$0x1]
        %v374 = vld [vmem:[%s3] sm:$0x1]
        %375 = vadd.xlane.f32.xlu0 %v364
        %v376 = vpop.xlane.xlu0 %375
        %377 = vadd.xlane.f32.xlu0 %v366
        %v378 = vpop.xlane.xlu0 %377
        %379 = vadd.xlane.f32.xlu0 %v369
        %v380 = vpop.xlane.xlu0 %379
        %381 = vadd.xlane.f32.xlu0 %v371
        %v382 = vpop.xlane.xlu0 %381
        %v383 = vmul.f32 %v376, 0.015625
        %v384 = vmul.f32 %v378, 0.015625
        %v385 = vmul.f32 %v380, 0.015625
        %v386 = vmul.f32 %v382, 0.015625
        %v387 = vsub.f32 %v364, %v383
        %v388 = vsub.f32 %v366, %v384
        %v389 = vsub.f32 %v369, %v385
        %v390 = vsub.f32 %v371, %v386
        %v391 = vmul.f32 %v387, %v387
        %v392 = vmul.f32 %v388, %v388
        %v393 = vmul.f32 %v389, %v389
        %v394 = vmul.f32 %v390, %v390
        %395 = vadd.xlane.f32.xlu0 %v391
        %v396 = vpop.xlane.xlu0 %395
        %397 = vadd.xlane.f32.xlu0 %v392
        %v398 = vpop.xlane.xlu0 %397
        %399 = vadd.xlane.f32.xlu0 %v393
        %v400 = vpop.xlane.xlu0 %399
        %401 = vadd.xlane.f32.xlu0 %v394
        %v402 = vpop.xlane.xlu0 %401
        %v403 = vmul.f32 %v383, %v383
        %v404 = vmul.f32 %v384, %v384
        %v405 = vmul.f32 %v385, %v385
        %v406 = vmul.f32 %v386, %v386
        %v407 = vmul.f32 %v403, 64.0
        %v408 = vmul.f32 %v404, 64.0
        %v409 = vmul.f32 %v405, 64.0
        %v410 = vmul.f32 %v406, 64.0
        %v411 = vsub.f32 %v396, %v407
        %v412 = vsub.f32 %v398, %v408
        %v413 = vsub.f32 %v400, %v409
        %v414 = vsub.f32 %v402, %v410
        %v415 = vmul.f32 %v411, 0.015625
        %v416 = vmul.f32 %v412, 0.015625
        %v417 = vmul.f32 %v413, 0.015625
        %v418 = vmul.f32 %v414, 0.015625
        %v419 = vmax.f32 %v415, 0.0
        %v420 = vmax.f32 %v416, 0.0
        %v421 = vmax.f32 %v417, 0.0
        %v422 = vmax.f32 %v418, 0.0
        %v423 = vadd.f32 %v419, 1e-05
        %v424 = vadd.f32 %v420, 1e-05
        %v425 = vadd.f32 %v421, 1e-05
        %v426 = vadd.f32 %v422, 1e-05
        %v427 = vrsqrt.pop %v423
        %v428 = vmul.f32 %v427, %v423
        %v429 = vmul.f32 %v428, %v427
        %v430 = vmul.f32 0.5, %v429
        %v431 = vsub.f32 1.5, %v430
        %v432 = vmul.f32 %v427, %v431
        %vm433 = vweird.f32 %v423
        %vm434 = vweird.f32 %v427
        %vm435 = vmor %vm433, %vm434
        %v436 = vsel %vm435, %v427, %v432
        %v437 = vrsqrt.pop %v424
        %v438 = vmul.f32 %v437, %v424
        %v439 = vmul.f32 %v438, %v437
        %v440 = vmul.f32 0.5, %v439
        %v441 = vsub.f32 1.5, %v440
        %v442 = vmul.f32 %v437, %v441
        %vm443 = vweird.f32 %v424
        %vm444 = vweird.f32 %v437
        %vm445 = vmor %vm443, %vm444
        %v446 = vsel %vm445, %v437, %v442
        %v447 = vrsqrt.pop %v425
        %v448 = vmul.f32 %v447, %v425
        %v449 = vmul.f32 %v448, %v447
        %v450 = vmul.f32 0.5, %v449
        %v451 = vsub.f32 1.5, %v450
        %v452 = vmul.f32 %v447, %v451
        %vm453 = vweird.f32 %v425
        %vm454 = vweird.f32 %v447
        %vm455 = vmor %vm453, %vm454
        %v456 = vsel %vm455, %v447, %v452
        %v457 = vrsqrt.pop %v426
        %v458 = vmul.f32 %v457, %v426
        %v459 = vmul.f32 %v458, %v457
        %v460 = vmul.f32 0.5, %v459
        %v461 = vsub.f32 1.5, %v460
        %v462 = vmul.f32 %v457, %v461
        %vm463 = vweird.f32 %v426
        %vm464 = vweird.f32 %v457
        %vm465 = vmor %vm463, %vm464
        %v466 = vsel %vm465, %v457, %v462
        %v467 = vmul.f32 %v387, %v436
        %v468 = vmul.f32 %v388, %v446
        %v469 = vmul.f32 %v389, %v456
        %v470 = vmul.f32 %v390, %v466
        %v472 = vperm.slane %v373, 0
        %v474 = vmul.f32 %v467, %v472
        %v475 = vmul.f32 %v468, %v472
        %v476 = vmul.f32 %v469, %v472
        %v477 = vmul.f32 %v470, %v472
        %v479 = vperm.slane %v374, 0
        %v481 = vadd.f32 %v474, %v479
        %v482 = vadd.f32 %v475, %v479
        %v483 = vadd.f32 %v476, %v479
        %v484 = vadd.f32 %v477, %v479
        %v485 = vmax.f32 %v481, 0.0
        %v486 = vmax.f32 %v482, 0.0
        %v487 = vmax.f32 %v483, 0.0
        %v488 = vmax.f32 %v484, 0.0
        %v489 = vpack.c.bf16 %v485, %v485
        %v490 = vpack.c.bf16 %v486, %v486
        %v491 = vpack.c.bf16 %v487, %v487
        %v492 = vpack.c.bf16 %v488, %v488
        %493 = vst [vmem:[#allocation2] sm:$0xf] %v489
        %494 = vst [vmem:[#allocation2 + $0x4] sm:$0xf] %v490
        %495 = vst [vmem:[#allocation2 + $0x8] sm:$0xf] %v491
        %496 = vst [vmem:[#allocation2 + $0xc] sm:$0xf] %v492
        %v497 = vld [vmem:[#allocation2] sm:$0xf]
        %v498 = vld [vmem:[#allocation2 + $0x4] sm:$0xf]
        %v499 = vld [vmem:[#allocation2 + $0x8] sm:$0xf]
        %v500 = vld [vmem:[#allocation2 + $0xc] sm:$0xf]
        %v501 = vld [vmem:[%s4] sm:$0xf]
        %v502 = vld [vmem:[%s4 + $0x4] sm:$0xf]
        %v503 = vld [vmem:[%s4 + $0x8] sm:$0xf]
        %v504 = vld [vmem:[%s4 + $0xc] sm:$0xf]
        %v505 = vld [vmem:[%s4 + $0x10] sm:$0xf]
        %v506 = vld [vmem:[%s4 + $0x14] sm:$0xf]
        %v507 = vld [vmem:[%s4 + $0x18] sm:$0xf]
        %v508 = vld [vmem:[%s4 + $0x1c] sm:$0xf]
        %v509 = vld [vmem:[%s4 + $0x20] sm:$0xf]
        %v510 = vld [vmem:[%s4 + $0x24] sm:$0xf]
        %v511 = vld [vmem:[%s4 + $0x28] sm:$0xf]
        %v512 = vld [vmem:[%s4 + $0x2c] sm:$0xf]
        %v513 = vld [vmem:[%s4 + $0x30] sm:$0xf]
        %v514 = vld [vmem:[%s4 + $0x34] sm:$0xf]
        %v515 = vld [vmem:[%s4 + $0x38] sm:$0xf]
        %v516 = vld [vmem:[%s4 + $0x3c] sm:$0xf]
        %v521 = vunpack.c.l.b16 %v497
        %v522 = vunpack.c.l.b16 %v498
        %v523 = vunpack.c.l.b16 %v499
        %v524 = vunpack.c.l.b16 %v500
        %v525 = vpack.c.b16 %v522, %v521
        %v526 = vpack.c.b16 %v524, %v523
        %v545 = vunpack.c.l.b16 %v501
        %v546 = vunpack.c.l.b16 %v502
        %v547 = vunpack.c.l.b16 %v503
        %v548 = vunpack.c.l.b16 %v504
        %v549 = vunpack.c.l.b16 %v505
        %v550 = vunpack.c.l.b16 %v506
        %v551 = vunpack.c.l.b16 %v507
        %v552 = vunpack.c.l.b16 %v508
        %v553 = vunpack.c.l.b16 %v509
        %v554 = vunpack.c.l.b16 %v510
        %v555 = vunpack.c.l.b16 %v511
        %v556 = vunpack.c.l.b16 %v512
        %v557 = vunpack.c.l.b16 %v513
        %v558 = vunpack.c.l.b16 %v514
        %v559 = vunpack.c.l.b16 %v515
        %v560 = vunpack.c.l.b16 %v516
        %v561 = vpack.c.b16 %v546, %v545
        %v562 = vpack.c.b16 %v548, %v547
        %v563 = vpack.c.b16 %v550, %v549
        %v564 = vpack.c.b16 %v552, %v551
        %v565 = vpack.c.b16 %v554, %v553
        %v566 = vpack.c.b16 %v556, %v555
        %v567 = vpack.c.b16 %v558, %v557
        %v568 = vpack.c.b16 %v560, %v559
        %577 = vmatpush.bf16.msra.mxu0 %v568
        %578 = vmatpush.bf16.msra.mxu0 %v567
        %579 = vmatpush.bf16.msra.mxu0 %v566
        %580 = vmatpush.bf16.msra.mxu0 %v565
        %581 = vmatpush.bf16.msra.mxu0 %v564
        %582 = vmatpush.bf16.msra.mxu0 %v563
        %583 = vmatpush.bf16.msra.mxu0 %v562
        %584 = vmatpush.bf16.msra.mxu0 %v561
        %585 = vmatmul.bf16.gmra.mxu0 %v525
        %v586 = vpop.f32.mrf.mxu0
        %v587 = vadd.f32 0.0, %v586
        %v588 = vpop.f32.mrf.mxu0
        %v589 = vadd.f32 0.0, %v588
        %590 = vmatmul.bf16.gmra.mxu0 %v526
        %v591 = vpop.f32.mrf.mxu0
        %v592 = vadd.f32 0.0, %v591
        %v593 = vpop.f32.mrf.mxu0
        %v594 = vadd.f32 0.0, %v593
        %595 = vdwg.mxu0
        %v596 = vld [vmem:[%s5] sm:$0x1]
        %v597 = vld [vmem:[%s6] sm:$0x1]
        %598 = vadd.xlane.f32.xlu0 %v587
        %v599 = vpop.xlane.xlu0 %598
        %600 = vadd.xlane.f32.xlu0 %v589
        %v601 = vpop.xlane.xlu0 %600
        %602 = vadd.xlane.f32.xlu0 %v592
        %v603 = vpop.xlane.xlu0 %602
        %604 = vadd.xlane.f32.xlu0 %v594
        %v605 = vpop.xlane.xlu0 %604
        %v606 = vmul.f32 %v599, 0.03125
        %v607 = vmul.f32 %v601, 0.03125
        %v608 = vmul.f32 %v603, 0.03125
        %v609 = vmul.f32 %v605, 0.03125
        %v610 = vsub.f32 %v587, %v606
        %v611 = vsub.f32 %v589, %v607
        %v612 = vsub.f32 %v592, %v608
        %v613 = vsub.f32 %v594, %v609
        %v614 = vmul.f32 %v610, %v610
        %v615 = vmul.f32 %v611, %v611
        %v616 = vmul.f32 %v612, %v612
        %v617 = vmul.f32 %v613, %v613
        %618 = vadd.xlane.f32.xlu0 %v614
        %v619 = vpop.xlane.xlu0 %618
        %620 = vadd.xlane.f32.xlu0 %v615
        %v621 = vpop.xlane.xlu0 %620
        %622 = vadd.xlane.f32.xlu0 %v616
        %v623 = vpop.xlane.xlu0 %622
        %624 = vadd.xlane.f32.xlu0 %v617
        %v625 = vpop.xlane.xlu0 %624
        %v626 = vmul.f32 %v606, %v606
        %v627 = vmul.f32 %v607, %v607
        %v628 = vmul.f32 %v608, %v608
        %v629 = vmul.f32 %v609, %v609
        %v630 = vmul.f32 %v626, 96.0
        %v631 = vmul.f32 %v627, 96.0
        %v632 = vmul.f32 %v628, 96.0
        %v633 = vmul.f32 %v629, 96.0
        %v634 = vsub.f32 %v619, %v630
        %v635 = vsub.f32 %v621, %v631
        %v636 = vsub.f32 %v623, %v632
        %v637 = vsub.f32 %v625, %v633
        %v638 = vmul.f32 %v634, 0.03125
        %v639 = vmul.f32 %v635, 0.03125
        %v640 = vmul.f32 %v636, 0.03125
        %v641 = vmul.f32 %v637, 0.03125
        %v642 = vmax.f32 %v638, 0.0
        %v643 = vmax.f32 %v639, 0.0
        %v644 = vmax.f32 %v640, 0.0
        %v645 = vmax.f32 %v641, 0.0
        %v646 = vadd.f32 %v642, 1e-05
        %v647 = vadd.f32 %v643, 1e-05
        %v648 = vadd.f32 %v644, 1e-05
        %v649 = vadd.f32 %v645, 1e-05
        %v650 = vrsqrt.pop %v646
        %v651 = vmul.f32 %v650, %v646
        %v652 = vmul.f32 %v651, %v650
        %v653 = vmul.f32 0.5, %v652
        %v654 = vsub.f32 1.5, %v653
        %v655 = vmul.f32 %v650, %v654
        %vm656 = vweird.f32 %v646
        %vm657 = vweird.f32 %v650
        %vm658 = vmor %vm656, %vm657
        %v659 = vsel %vm658, %v650, %v655
        %v660 = vrsqrt.pop %v647
        %v661 = vmul.f32 %v660, %v647
        %v662 = vmul.f32 %v661, %v660
        %v663 = vmul.f32 0.5, %v662
        %v664 = vsub.f32 1.5, %v663
        %v665 = vmul.f32 %v660, %v664
        %vm666 = vweird.f32 %v647
        %vm667 = vweird.f32 %v660
        %vm668 = vmor %vm666, %vm667
        %v669 = vsel %vm668, %v660, %v665
        %v670 = vrsqrt.pop %v648
        %v671 = vmul.f32 %v670, %v648
        %v672 = vmul.f32 %v671, %v670
        %v673 = vmul.f32 0.5, %v672
        %v674 = vsub.f32 1.5, %v673
        %v675 = vmul.f32 %v670, %v674
        %vm676 = vweird.f32 %v648
        %vm677 = vweird.f32 %v670
        %vm678 = vmor %vm676, %vm677
        %v679 = vsel %vm678, %v670, %v675
        %v680 = vrsqrt.pop %v649
        %v681 = vmul.f32 %v680, %v649
        %v682 = vmul.f32 %v681, %v680
        %v683 = vmul.f32 0.5, %v682
        %v684 = vsub.f32 1.5, %v683
        %v685 = vmul.f32 %v680, %v684
        %vm686 = vweird.f32 %v649
        %vm687 = vweird.f32 %v680
        %vm688 = vmor %vm686, %vm687
        %v689 = vsel %vm688, %v680, %v685
        %v690 = vmul.f32 %v610, %v659
        %v691 = vmul.f32 %v611, %v669
        %v692 = vmul.f32 %v612, %v679
        %v693 = vmul.f32 %v613, %v689
        %v695 = vperm.slane %v596, 0
        %v697 = vmul.f32 %v690, %v695
        %v698 = vmul.f32 %v691, %v695
        %v699 = vmul.f32 %v692, %v695
        %v700 = vmul.f32 %v693, %v695
        %v702 = vperm.slane %v597, 0
        %v704 = vadd.f32 %v697, %v702
        %v705 = vadd.f32 %v698, %v702
        %v706 = vadd.f32 %v699, %v702
        %v707 = vadd.f32 %v700, %v702
        %v708 = vmax.f32 %v704, 0.0
        %v709 = vmax.f32 %v705, 0.0
        %v710 = vmax.f32 %v706, 0.0
        %v711 = vmax.f32 %v707, 0.0
        %v712 = vpack.c.bf16 %v708, %v708
        %v713 = vpack.c.bf16 %v709, %v709
        %v714 = vpack.c.bf16 %v710, %v710
        %v715 = vpack.c.bf16 %v711, %v711
        %716 = vst [vmem:[#allocation3] sm:$0xf] %v712
        %717 = vst [vmem:[#allocation3 + $0x4] sm:$0xf] %v713
        %718 = vst [vmem:[#allocation3 + $0x8] sm:$0xf] %v714
        %719 = vst [vmem:[#allocation3 + $0xc] sm:$0xf] %v715
        %v720 = vld [vmem:[#allocation3] sm:$0xf]
        %v721 = vld [vmem:[#allocation3 + $0x4] sm:$0xf]
        %v722 = vld [vmem:[#allocation3 + $0x8] sm:$0xf]
        %v723 = vld [vmem:[#allocation3 + $0xc] sm:$0xf]
        %v724 = vld [vmem:[#allocation4] sm:$0xf]
        %v725 = vld [vmem:[#allocation4 + $0x4] sm:$0xf]
        %v726 = vld [vmem:[#allocation4 + $0x8] sm:$0xf]
        %v727 = vld [vmem:[#allocation4 + $0xc] sm:$0xf]
        %v728 = vld [vmem:[#allocation4 + $0x10] sm:$0xf]
        %v729 = vld [vmem:[#allocation4 + $0x14] sm:$0xf]
        %v730 = vld [vmem:[#allocation4 + $0x18] sm:$0xf]
        %v731 = vld [vmem:[#allocation4 + $0x1c] sm:$0xf]
        %v732 = vld [vmem:[#allocation4 + $0x20] sm:$0xf]
        %v733 = vld [vmem:[#allocation4 + $0x24] sm:$0xf]
        %v734 = vld [vmem:[#allocation4 + $0x28] sm:$0xf]
        %v735 = vld [vmem:[#allocation4 + $0x2c] sm:$0xf]
        %v736 = vld [vmem:[#allocation4 + $0x30] sm:$0xf]
        %v737 = vld [vmem:[#allocation4 + $0x34] sm:$0xf]
        %v738 = vld [vmem:[#allocation4 + $0x38] sm:$0xf]
        %v739 = vld [vmem:[#allocation4 + $0x3c] sm:$0xf]
        %v744 = vunpack.c.l.b16 %v720
        %v745 = vunpack.c.l.b16 %v721
        %v746 = vunpack.c.l.b16 %v722
        %v747 = vunpack.c.l.b16 %v723
        %v748 = vpack.c.b16 %v745, %v744
        %v749 = vpack.c.b16 %v747, %v746
        %v768 = vunpack.c.l.b16 %v724
        %v769 = vunpack.c.l.b16 %v725
        %v770 = vunpack.c.l.b16 %v726
        %v771 = vunpack.c.l.b16 %v727
        %v772 = vunpack.c.l.b16 %v728
        %v773 = vunpack.c.l.b16 %v729
        %v774 = vunpack.c.l.b16 %v730
        %v775 = vunpack.c.l.b16 %v731
        %v776 = vunpack.c.l.b16 %v732
        %v777 = vunpack.c.l.b16 %v733
        %v778 = vunpack.c.l.b16 %v734
        %v779 = vunpack.c.l.b16 %v735
        %v780 = vunpack.c.l.b16 %v736
        %v781 = vunpack.c.l.b16 %v737
        %v782 = vunpack.c.l.b16 %v738
        %v783 = vunpack.c.l.b16 %v739
        %v784 = vpack.c.b16 %v769, %v768
        %v785 = vpack.c.b16 %v771, %v770
        %v786 = vpack.c.b16 %v773, %v772
        %v787 = vpack.c.b16 %v775, %v774
        %v788 = vpack.c.b16 %v777, %v776
        %v789 = vpack.c.b16 %v779, %v778
        %v790 = vpack.c.b16 %v781, %v780
        %v791 = vpack.c.b16 %v783, %v782
        %800 = vmatpush.bf16.msra.mxu0 %v791
        %801 = vmatpush.bf16.msra.mxu0 %v790
        %802 = vmatpush.bf16.msra.mxu0 %v789
        %803 = vmatpush.bf16.msra.mxu0 %v788
        %804 = vmatpush.bf16.msra.mxu0 %v787
        %805 = vmatpush.bf16.msra.mxu0 %v786
        %806 = vmatpush.bf16.msra.mxu0 %v785
        %807 = vmatpush.bf16.msra.mxu0 %v784
        %808 = vmatmul.bf16.gmra.mxu0 %v748
        %v809 = vpop.f32.mrf.mxu0
        %v810 = vadd.f32 0.0, %v809
        %v811 = vpop.f32.mrf.mxu0
        %v812 = vadd.f32 0.0, %v811
        %813 = vmatmul.bf16.gmra.mxu0 %v749
        %v814 = vpop.f32.mrf.mxu0
        %v815 = vadd.f32 0.0, %v814
        %v816 = vpop.f32.mrf.mxu0
        %v817 = vadd.f32 0.0, %v816
        %818 = vdwg.mxu0
        %v819 = vmax.f32 %v810, 0.0
        %v820 = vmax.f32 %v812, 0.0
        %v821 = vmax.f32 %v815, 0.0
        %v822 = vmax.f32 %v817, 0.0
        %823 = vst [vmem:[%s316] sm:$0xff] %v819
        %824 = vst [vmem:[%s316 + $0x8] sm:$0xff] %v820
        %825 = vst [vmem:[%s316 + $0x10] sm:$0xff] %v821
        %826 = vst [vmem:[%s316 + $0x18] sm:$0xff] %v822
        %s827 = sand.u32 %s204, 1
        %s828 = scalar_lea.sflag [#allocation6], %s827
        %s829 = sand.u32 %s204, 1
        %s830 = smul.addr %s829, 32
        %s831 = scalar_lea.vmem [#allocation7], %s830
        // Predicated region
        $region57: #{tpu_custom_call.1} parent=51 // pred_check
          %p832 = pneg %p214
        $region58: #{tpu_custom_call.1} parent=51 // pred_check_branch
          %834 = sbr.rel (%p832) target = $region60
        $region59: #{tpu_custom_call.1} parent=51 // pred_region
          %s835 = smul.u32 4, %s23
          %837 = vsyncadd %s828, 0
          %s838 = smul.addr %s835, 8
          %s839 = scalar_lea.hbm %s8, %s838
          %s840 = sshll.u32 %s831, 4
          %s841 = int_to_ptr.vmem [resolvable:$true] %s840
          %s842 = sshll.u32 %s839, 4
          %s843 = int_to_ptr.hbm [resolvable:$true] %s842
          %848 = dma.vmem_to_hbm [thread:$0]  %s841, 512, %s843, %s828, 128, 128, 8
        $region60: #{tpu_custom_call.1} parent=51 // pred_fallthru
          _
      $region52: #{tpu_custom_call.1} parent=5 // pred_fallthru
        _
      %p849 = scmp.le.s32.totalorder 2, %s18
      // Predicated region
      $region61: #{tpu_custom_call.1} parent=5 // pred_check
        %p850 = pneg %p849
      $region62: #{tpu_custom_call.1} parent=5 // pred_check_branch
        %852 = sbr.rel (%p850) target = $region64
      $region63: #{tpu_custom_call.1} parent=5 // pred_region
        %s853 = ssub.s32 %s18, 2
        // Predicated region
        $region65: #{tpu_custom_call.1} parent=63 // pred_check
          %p854 = pneg %p220
        $region66: #{tpu_custom_call.1} parent=63 // pred_check_branch
          %856 = sbr.rel (%p854) target = $region68
        $region67: #{tpu_custom_call.1} parent=63 // pred_region
          %s857 = sand.u32 %s205, 1
          %s858 = scalar_lea.sflag [#allocation6], %s857
          %s859 = sand.u32 %s205, 1
          %s860 = smul.addr %s859, 32
          %s861 = scalar_lea.vmem [#allocation7], %s860
          %863 = dma.done %s858, 512
        $region68: #{tpu_custom_call.1} parent=63 // pred_fallthru
          _
      $region64: #{tpu_custom_call.1} parent=5 // pred_fallthru
        _
    $region6: #{tpu_custom_call.1} parent=1 // loop_footer
      %s22 = sadd.s32 1, %s18
    $region7: #{tpu_custom_call.1} parent=1 // loop_footer_branch
      %17 = sbr.rel target = $region3
    $region8: #{tpu_custom_call.1} parent=1 // loop_exit
      _
    %864 = vsyncpa [#allocation5], 1
    %s865 = scalar_lea.sflag [#allocation5], 1
    %866 = vsyncpa %s865, 1
    %867 = vsyncpa [#allocation6], 1
    %s868 = scalar_lea.sflag [#allocation6], 1
    %869 = vsyncpa %s868, 1

</llo_original>
